<compile_context>
chip_gen: v5e
topology: v5e:2x2
jax: 0.10.0
libtpu: 0.0.40
codegen_flags: <defaults>
</compile_context>

<pallas_src>
import jax
import jax.numpy as jnp
from jax.experimental import pallas as pl
from jax.experimental.pallas import tpu as pltpu


# ----------------------------------------------------------------------------
# Fused, interleaved bidirectional GRU kernel (no grid; whole arrays in VMEM).
# ----------------------------------------------------------------------------
def bigru_kernel(x_ref, wxf_ref, wxb_ref, whf_ref, whb_ref,
                 bxf_ref, bxb_ref, bhnf_ref, bhnb_ref,
                 out_ref, gxf_s, gxb_s):
    T, Bp, H2 = out_ref.shape
    H = H2 // 2
    H3 = 3 * H

    # ---- hoisted fused input projections: one MXU pass per direction over ALL
    # timesteps and all 3 gates: (T*Bp, D) x (D, 3H), bf16 operands, f32 accum ----
    x = x_ref[...]                                          # bf16 (T*Bp, D)
    gxf_s[...] = jnp.dot(x, wxf_ref[...],
                         preferred_element_type=jnp.float32) + bxf_ref[...]
    gxb_s[...] = jnp.dot(x, wxb_ref[...],
                         preferred_element_type=jnp.float32) + bxb_ref[...]

    whf = whf_ref[...]                                      # bf16 (H, 3H)
    whb = whb_ref[...]
    bhnf = jnp.broadcast_to(bhnf_ref[...], (Bp, H))         # hoisted out of the loop
    bhnb = jnp.broadcast_to(bhnb_ref[...], (Bp, H))

    def cell(gx, gh, h, bhn):
        # PyTorch nn.GRU cell: gate order r, z, n; r gates (W_hn h + b_hn).
        r = jax.nn.sigmoid(gx[:, 0:H] + gh[:, 0:H])
        z = jax.nn.sigmoid(gx[:, H:2 * H] + gh[:, H:2 * H])
        n = jnp.tanh(gx[:, 2 * H:H3] + r * (gh[:, 2 * H:H3] + bhn))
        return (1.0 - z) * n + z * h

    def step(s, carry):
        hf, hb = carry                                      # f32 (Bp, H) each
        tf = s                                              # forward time index
        tb = T - 1 - s                                      # backward time index
        off_f = pl.multiple_of(tf * Bp, 8)
        off_b = pl.multiple_of(tb * Bp, 8)
        gxf = gxf_s[pl.ds(off_f, Bp), :]
        gxb = gxb_s[pl.ds(off_b, Bp), :]
        # ONE fused (Bp,H)x(H,3H) hidden matmul per direction per step; the two
        # independent direction chains interleave and hide each other's latency.
        ghf = jnp.dot(hf.astype(jnp.bfloat16), whf,
                      preferred_element_type=jnp.float32)
        ghb = jnp.dot(hb.astype(jnp.bfloat16), whb,
                      preferred_element_type=jnp.float32)
        hf_new = cell(gxf, ghf, hf, bhnf)
        hb_new = cell(gxb, ghb, hb, bhnb)
        # Write the concatenated output layout directly (no host-side concat).
        out_ref[tf, :, 0:H] = hf_new.astype(out_ref.dtype)
        out_ref[tb, :, H:H2] = hb_new.astype(out_ref.dtype)
        return (hf_new, hb_new)

    h0 = jnp.zeros((Bp, H), jnp.float32)
    # Full unroll for short T; capped partial unroll if T grows.
    jax.lax.fori_loop(0, T, step, (h0, h0), unroll=min(T, 8))


# ----------------------------------------------------------------------------
# Host-side parameter prep: fuse PyTorch-layout GRU weights into per-direction
# (D,3H)/(H,3H) blocks (transposed for lane-dense RHS) and pre-sum biases.
# ----------------------------------------------------------------------------
def _prep_direction(params):
    w_ih, w_hh, b_ih, b_hh = params              # (3H,D), (3H,H), (3H,), (3H,)
    H = w_hh.shape[1]
    wx = w_ih.T.astype(jnp.bfloat16)             # (D, 3H), gate cols [r | z | n]
    wh = w_hh.T.astype(jnp.bfloat16)             # (H, 3H)
    bx = jnp.concatenate([b_ih[0:H] + b_hh[0:H],
                          b_ih[H:2 * H] + b_hh[H:2 * H],
                          b_ih[2 * H:3 * H]])[None, :].astype(jnp.float32)  # (1,3H)
    bhn = b_hh[2 * H:3 * H][None, :].astype(jnp.float32)                    # (1,H)
    return wx, wh, bx, bhn


@jax.jit
def gru_context(allfeatures, fgru_params, bgru_params):
    """Bidirectional context GRU: (T, B, D) -> (T, B, 2H)."""
    T, B, D = allfeatures.shape
    H = fgru_params[1].shape[1]

    # Pad batch to the 8-sublane minimum so matmuls / stores are not mostly masking.
    Bp = max(8, -(-B // 8) * 8)
    x = allfeatures
    if Bp != B:
        x = jnp.pad(x, ((0, 0), (0, Bp - B), (0, 0)))
    x2d = x.reshape(T * Bp, D).astype(jnp.bfloat16)        # bf16 MXU operands

    wxf, whf, bxf, bhnf = _prep_direction(fgru_params)
    wxb, whb, bxb, bhnb = _prep_direction(bgru_params)

    out = pl.pallas_call(
        bigru_kernel,
        out_shape=jax.ShapeDtypeStruct((T, Bp, 2 * H), jnp.float32),
        # No grid: whole arrays resident in VMEM, no double-buffering overhead.
        in_specs=[pl.BlockSpec(memory_space=pltpu.MemorySpace.VMEM)
                  for _ in range(9)],
        out_specs=pl.BlockSpec(memory_space=pltpu.MemorySpace.VMEM),
        scratch_shapes=[pltpu.VMEM((T * Bp, 3 * H), jnp.float32),
                        pltpu.VMEM((T * Bp, 3 * H), jnp.float32)],
        compiler_params=pltpu.CompilerParams(
            vmem_limit_bytes=32 * 1024 * 1024),            # VMEM guard (v7x-safe)
    )(x2d, wxf, wxb, whf, whb, bxf, bxb, bhnf, bhnb)

    return out[:, :B, :]


# ----------------------------------------------------------------------------
# Parameter init (deterministic, PyTorch-style uniform(-1/sqrt(H), 1/sqrt(H))),
# stored in PyTorch layout: W_ih (3H,D), W_hh (3H,H), b_ih (3H,), b_hh (3H,).
# ----------------------------------------------------------------------------
def init_gru_params(key, D, H):
    k = 1.0 / jnp.sqrt(jnp.float32(H))
    k1, k2, k3, k4 = jax.random.split(key, 4)
    w_ih = jax.random.uniform(k1, (3 * H, D), jnp.float32, -k, k)
    w_hh = jax.random.uniform(k2, (3 * H, H), jnp.float32, -k, k)
    b_ih = jax.random.uniform(k3, (3 * H,), jnp.float32, -k, k)
    b_hh = jax.random.uniform(k4, (3 * H,), jnp.float32, -k, k)
    return (w_ih, w_hh, b_ih, b_hh)


# Pure-JAX reference (lax.scan), PyTorch nn.GRU semantics.  `matmul_dtype` lets us
# build a bf16-operand-consistent reference for tight comparison with the kernel.
def gru_sequence_ref(x, w_ih, w_hh, b_ih, b_hh, matmul_dtype=jnp.float32):
    H = w_hh.shape[1]
    w_ih_t = w_ih.T.astype(matmul_dtype)
    w_hh_t = w_hh.T.astype(matmul_dtype)

    def step(h, x_t):
        gx = jnp.dot(x_t.astype(matmul_dtype), w_ih_t,
                     preferred_element_type=jnp.float32) + b_ih
        gh = jnp.dot(h.astype(matmul_dtype), w_hh_t,
                     preferred_element_type=jnp.float32) + b_hh
        r = jax.nn.sigmoid(gx[:, 0:H] + gh[:, 0:H])
        z = jax.nn.sigmoid(gx[:, H:2 * H] + gh[:, H:2 * H])
        n = jnp.tanh(gx[:, 2 * H:] + r * gh[:, 2 * H:])
        h_new = (1.0 - z) * n + z * h
        return h_new, h_new

    h0 = jnp.zeros((x.shape[1], H), jnp.float32)
    _, ys = jax.lax.scan(step, h0, x)
    return ys


if __name__ == "__main__":
    T, B, D, H = 8, 4, 16, 32

    key = jax.random.PRNGKey(0)
    kx, kf, kb = jax.random.split(key, 3)
    allfeatures = jax.random.normal(kx, (T, B, D), jnp.float32)
    fgru = init_gru_params(kf, D, H)
    bgru = init_gru_params(kb, D, H)

    out = jax.block_until_ready(gru_context(allfeatures, fgru, bgru))
    assert out.shape == (T, B, 2 * H), out.shape

    # Tight check vs a bf16-matmul-consistent reference (kernel uses bf16 MXU
    # operands with f32 accumulation).
    ref_fwd = gru_sequence_ref(allfeatures, *fgru, matmul_dtype=jnp.bfloat16)
    ref_bwd = gru_sequence_ref(allfeatures[::-1], *bgru,
                               matmul_dtype=jnp.bfloat16)[::-1]
    ref = jnp.concatenate([ref_fwd, ref_bwd], axis=-1)
    err = float(jnp.max(jnp.abs(out - ref)))
    assert err < 5e-3, err

    # Loose sanity check vs the exact f32 PyTorch-semantics reference
    # (small bf16-operand drift over the recurrence is expected).
    ref32_fwd = gru_sequence_ref(allfeatures, *fgru)
    ref32_bwd = gru_sequence_ref(allfeatures[::-1], *bgru)[::-1]
    ref32 = jnp.concatenate([ref32_fwd, ref32_bwd], axis=-1)
    err32 = float(jnp.max(jnp.abs(out - ref32)))
    assert err32 < 1e-1, err32

    print("KERNEL_OK")
</pallas_src>

<mosaic_0001>
module attributes {stable_mosaic.version = 11 : i64} {
  func.func @bigru_kernel(%arg0: memref<64x16xbf16, #tpu.memory_space<vmem>>, %arg1: memref<16x96xbf16, #tpu.memory_space<vmem>>, %arg2: memref<16x96xbf16, #tpu.memory_space<vmem>>, %arg3: memref<32x96xbf16, #tpu.memory_space<vmem>>, %arg4: memref<32x96xbf16, #tpu.memory_space<vmem>>, %arg5: memref<1x96xf32, #tpu.memory_space<vmem>>, %arg6: memref<1x96xf32, #tpu.memory_space<vmem>>, %arg7: memref<1x32xf32, #tpu.memory_space<vmem>>, %arg8: memref<1x32xf32, #tpu.memory_space<vmem>>, %arg9: memref<8x8x64xf32, #tpu.memory_space<vmem>>, %arg10: memref<64x96xf32, #tpu.memory_space<vmem>>, %arg11: memref<64x96xf32, #tpu.memory_space<vmem>>) attributes {dimension_semantics = [], scalar_prefetch = 0 : i64, scratch_operands = 2 : i64, tpu.core_type = #tpu.core_type<tc>} {
    %c0 = arith.constant 0 : index
    %c0_0 = arith.constant 0 : index
    %0 = vector.load %arg0[%c0, %c0_0] : memref<64x16xbf16, #tpu.memory_space<vmem>>, vector<64x16xbf16>
    %c0_1 = arith.constant 0 : index
    %c0_2 = arith.constant 0 : index
    %1 = vector.load %arg1[%c0_1, %c0_2] : memref<16x96xbf16, #tpu.memory_space<vmem>>, vector<16x96xbf16>
    %cst = arith.constant dense<0.000000e+00> : vector<64x96xf32>
    %2 = tpu.matmul %0, %1, %cst {dimension_numbers = #tpu.dot_dimension_numbers<[1], [0], [0], [1], [0, 0, 1, 1], [], []>} : vector<64x16xbf16>, vector<16x96xbf16>, vector<64x96xf32> -> vector<64x96xf32>
    %c0_3 = arith.constant 0 : index
    %c0_4 = arith.constant 0 : index
    %3 = vector.load %arg5[%c0_3, %c0_4] : memref<1x96xf32, #tpu.memory_space<vmem>>, vector<1x96xf32>
    %4 = vector.broadcast %3 : vector<1x96xf32> to vector<64x96xf32>
    %5 = arith.addf %2, %4 : vector<64x96xf32>
    %c0_5 = arith.constant 0 : index
    %c0_6 = arith.constant 0 : index
    %6 = vector.load %arg10[%c0_5, %c0_6] : memref<64x96xf32, #tpu.memory_space<vmem>>, vector<64x96xf32>
    tpu.vector_store %arg10[%c0_5, %c0_6], %5 {strides = array<i32>} : memref<64x96xf32, #tpu.memory_space<vmem>>, vector<64x96xf32>,
    %c0_7 = arith.constant 0 : index
    %c0_8 = arith.constant 0 : index
    %7 = vector.load %arg2[%c0_7, %c0_8] : memref<16x96xbf16, #tpu.memory_space<vmem>>, vector<16x96xbf16>
    %cst_9 = arith.constant dense<0.000000e+00> : vector<64x96xf32>
    %8 = tpu.matmul %0, %7, %cst_9 {dimension_numbers = #tpu.dot_dimension_numbers<[1], [0], [0], [1], [0, 0, 1, 1], [], []>} : vector<64x16xbf16>, vector<16x96xbf16>, vector<64x96xf32> -> vector<64x96xf32>
    %c0_10 = arith.constant 0 : index
    %c0_11 = arith.constant 0 : index
    %9 = vector.load %arg6[%c0_10, %c0_11] : memref<1x96xf32, #tpu.memory_space<vmem>>, vector<1x96xf32>
    %10 = vector.broadcast %9 : vector<1x96xf32> to vector<64x96xf32>
    %11 = arith.addf %8, %10 : vector<64x96xf32>
    %c0_12 = arith.constant 0 : index
    %c0_13 = arith.constant 0 : index
    %12 = vector.load %arg11[%c0_12, %c0_13] : memref<64x96xf32, #tpu.memory_space<vmem>>, vector<64x96xf32>
    tpu.vector_store %arg11[%c0_12, %c0_13], %11 {strides = array<i32>} : memref<64x96xf32, #tpu.memory_space<vmem>>, vector<64x96xf32>,
    %c0_14 = arith.constant 0 : index
    %c0_15 = arith.constant 0 : index
    %13 = vector.load %arg3[%c0_14, %c0_15] : memref<32x96xbf16, #tpu.memory_space<vmem>>, vector<32x96xbf16>
    %c0_16 = arith.constant 0 : index
    %c0_17 = arith.constant 0 : index
    %14 = vector.load %arg4[%c0_16, %c0_17] : memref<32x96xbf16, #tpu.memory_space<vmem>>, vector<32x96xbf16>
    %c0_18 = arith.constant 0 : index
    %c0_19 = arith.constant 0 : index
    %15 = vector.load %arg7[%c0_18, %c0_19] : memref<1x32xf32, #tpu.memory_space<vmem>>, vector<1x32xf32>
    %16 = vector.shape_cast %15 : vector<1x32xf32> to vector<1x32xf32>
    %17 = vector.broadcast %16 : vector<1x32xf32> to vector<8x32xf32>
    %c0_20 = arith.constant 0 : index
    %c0_21 = arith.constant 0 : index
    %18 = vector.load %arg8[%c0_20, %c0_21] : memref<1x32xf32, #tpu.memory_space<vmem>>, vector<1x32xf32>
    %19 = vector.shape_cast %18 : vector<1x32xf32> to vector<1x32xf32>
    %20 = vector.broadcast %19 : vector<1x32xf32> to vector<8x32xf32>
    %cst_22 = arith.constant 0.000000e+00 : f32
    %21 = vector.broadcast %cst_22 : f32 to vector<8x32xf32>
    %c0_i32 = arith.constant 0 : i32
    %c7_i32 = arith.constant 7 : i32
    %22 = arith.subi %c7_i32, %c0_i32 : i32
    %c8_i32 = arith.constant 8 : i32
    %23 = arith.muli %c0_i32, %c8_i32 : i32
    %24 = tpu.assume_multiple %23, 8 : i32
    %c8_i32_23 = arith.constant 8 : i32
    %25 = arith.muli %22, %c8_i32_23 : i32
    %26 = tpu.assume_multiple %25, 8 : i32
    %27 = arith.index_cast %24 : i32 to index
    %c0_24 = arith.constant 0 : index
    %28 = vector.load %arg10[%27, %c0_24] : memref<64x96xf32, #tpu.memory_space<vmem>>, vector<8x96xf32>
    %29 = arith.index_cast %26 : i32 to index
    %c0_25 = arith.constant 0 : index
    %30 = vector.load %arg11[%29, %c0_25] : memref<64x96xf32, #tpu.memory_space<vmem>>, vector<8x96xf32>
    %31 = arith.truncf %21 : vector<8x32xf32> to vector<8x32xbf16>
    %cst_26 = arith.constant dense<0.000000e+00> : vector<8x96xf32>
    %32 = tpu.matmul %31, %13, %cst_26 {dimension_numbers = #tpu.dot_dimension_numbers<[1], [0], [0], [1], [0, 0, 1, 1], [], []>} : vector<8x32xbf16>, vector<32x96xbf16>, vector<8x96xf32> -> vector<8x96xf32>
    %33 = arith.truncf %21 : vector<8x32xf32> to vector<8x32xbf16>
    %cst_27 = arith.constant dense<0.000000e+00> : vector<8x96xf32>
    %34 = tpu.matmul %33, %14, %cst_27 {dimension_numbers = #tpu.dot_dimension_numbers<[1], [0], [0], [1], [0, 0, 1, 1], [], []>} : vector<8x32xbf16>, vector<32x96xbf16>, vector<8x96xf32> -> vector<8x96xf32>
    %35 = vector.extract_strided_slice %28 {offsets = [0, 0], sizes = [8, 32], strides = [1, 1]} : vector<8x96xf32> to vector<8x32xf32>
    %36 = vector.extract_strided_slice %32 {offsets = [0, 0], sizes = [8, 32], strides = [1, 1]} : vector<8x96xf32> to vector<8x32xf32>
    %37 = arith.addf %35, %36 : vector<8x32xf32>
    %38 = arith.negf %37 : vector<8x32xf32>
    %39 = math.exp %38 : vector<8x32xf32>
    %cst_28 = arith.constant 1.000000e+00 : f32
    %40 = vector.broadcast %cst_28 : f32 to vector<8x32xf32>
    %41 = arith.addf %40, %39 : vector<8x32xf32>
    %42 = arith.divf %40, %41 : vector<8x32xf32>
    %43 = vector.extract_strided_slice %28 {offsets = [0, 32], sizes = [8, 32], strides = [1, 1]} : vector<8x96xf32> to vector<8x32xf32>
    %44 = vector.extract_strided_slice %32 {offsets = [0, 32], sizes = [8, 32], strides = [1, 1]} : vector<8x96xf32> to vector<8x32xf32>
    %45 = arith.addf %43, %44 : vector<8x32xf32>
    %46 = arith.negf %45 : vector<8x32xf32>
    %47 = math.exp %46 : vector<8x32xf32>
    %cst_29 = arith.constant 1.000000e+00 : f32
    %48 = vector.broadcast %cst_29 : f32 to vector<8x32xf32>
    %49 = arith.addf %48, %47 : vector<8x32xf32>
    %50 = arith.divf %48, %49 : vector<8x32xf32>
    %51 = vector.extract_strided_slice %28 {offsets = [0, 64], sizes = [8, 32], strides = [1, 1]} : vector<8x96xf32> to vector<8x32xf32>
    %52 = vector.extract_strided_slice %32 {offsets = [0, 64], sizes = [8, 32], strides = [1, 1]} : vector<8x96xf32> to vector<8x32xf32>
    %53 = arith.addf %52, %17 : vector<8x32xf32>
    %54 = arith.mulf %42, %53 : vector<8x32xf32>
    %55 = arith.addf %51, %54 : vector<8x32xf32>
    %56 = math.tanh %55 : vector<8x32xf32>
    %cst_30 = arith.constant 1.000000e+00 : f32
    %57 = vector.broadcast %cst_30 : f32 to vector<8x32xf32>
    %58 = arith.subf %57, %50 : vector<8x32xf32>
    %59 = arith.mulf %58, %56 : vector<8x32xf32>
    %60 = arith.mulf %50, %21 : vector<8x32xf32>
    %61 = arith.addf %59, %60 : vector<8x32xf32>
    %62 = vector.extract_strided_slice %30 {offsets = [0, 0], sizes = [8, 32], strides = [1, 1]} : vector<8x96xf32> to vector<8x32xf32>
    %63 = vector.extract_strided_slice %34 {offsets = [0, 0], sizes = [8, 32], strides = [1, 1]} : vector<8x96xf32> to vector<8x32xf32>
    %64 = arith.addf %62, %63 : vector<8x32xf32>
    %65 = arith.negf %64 : vector<8x32xf32>
    %66 = math.exp %65 : vector<8x32xf32>
    %cst_31 = arith.constant 1.000000e+00 : f32
    %67 = vector.broadcast %cst_31 : f32 to vector<8x32xf32>
    %68 = arith.addf %67, %66 : vector<8x32xf32>
    %69 = arith.divf %67, %68 : vector<8x32xf32>
    %70 = vector.extract_strided_slice %30 {offsets = [0, 32], sizes = [8, 32], strides = [1, 1]} : vector<8x96xf32> to vector<8x32xf32>
    %71 = vector.extract_strided_slice %34 {offsets = [0, 32], sizes = [8, 32], strides = [1, 1]} : vector<8x96xf32> to vector<8x32xf32>
    %72 = arith.addf %70, %71 : vector<8x32xf32>
    %73 = arith.negf %72 : vector<8x32xf32>
    %74 = math.exp %73 : vector<8x32xf32>
    %cst_32 = arith.constant 1.000000e+00 : f32
    %75 = vector.broadcast %cst_32 : f32 to vector<8x32xf32>
    %76 = arith.addf %75, %74 : vector<8x32xf32>
    %77 = arith.divf %75, %76 : vector<8x32xf32>
    %78 = vector.extract_strided_slice %30 {offsets = [0, 64], sizes = [8, 32], strides = [1, 1]} : vector<8x96xf32> to vector<8x32xf32>
    %79 = vector.extract_strided_slice %34 {offsets = [0, 64], sizes = [8, 32], strides = [1, 1]} : vector<8x96xf32> to vector<8x32xf32>
    %80 = arith.addf %79, %20 : vector<8x32xf32>
    %81 = arith.mulf %69, %80 : vector<8x32xf32>
    %82 = arith.addf %78, %81 : vector<8x32xf32>
    %83 = math.tanh %82 : vector<8x32xf32>
    %cst_33 = arith.constant 1.000000e+00 : f32
    %84 = vector.broadcast %cst_33 : f32 to vector<8x32xf32>
    %85 = arith.subf %84, %77 : vector<8x32xf32>
    %86 = arith.mulf %85, %83 : vector<8x32xf32>
    %87 = arith.mulf %77, %21 : vector<8x32xf32>
    %88 = arith.addf %86, %87 : vector<8x32xf32>
    %89 = arith.index_cast %c0_i32 : i32 to index
    %c0_34 = arith.constant 0 : index
    %c0_35 = arith.constant 0 : index
    %90 = vector.load %arg9[%89, %c0_34, %c0_35] : memref<8x8x64xf32, #tpu.memory_space<vmem>>, vector<1x8x32xf32>
    %91 = vector.shape_cast %90 : vector<1x8x32xf32> to vector<8x32xf32>
    %92 = vector.shape_cast %61 : vector<8x32xf32> to vector<1x8x32xf32>
    tpu.vector_store %arg9[%89, %c0_34, %c0_35], %92 {strides = array<i32>} : memref<8x8x64xf32, #tpu.memory_space<vmem>>, vector<1x8x32xf32>,
    %93 = arith.index_cast %22 : i32 to index
    %c0_36 = arith.constant 0 : index
    %c32 = arith.constant 32 : index
    %94 = vector.load %arg9[%93, %c0_36, %c32] : memref<8x8x64xf32, #tpu.memory_space<vmem>>, vector<1x8x32xf32>
    %95 = vector.shape_cast %94 : vector<1x8x32xf32> to vector<8x32xf32>
    %96 = vector.shape_cast %88 : vector<8x32xf32> to vector<1x8x32xf32>
    tpu.vector_store %arg9[%93, %c0_36, %c32], %96 {strides = array<i32>} : memref<8x8x64xf32, #tpu.memory_space<vmem>>, vector<1x8x32xf32>,
    %c1_i32 = arith.constant 1 : i32
    %c7_i32_37 = arith.constant 7 : i32
    %97 = arith.subi %c7_i32_37, %c1_i32 : i32
    %c8_i32_38 = arith.constant 8 : i32
    %98 = arith.muli %c1_i32, %c8_i32_38 : i32
    %99 = tpu.assume_multiple %98, 8 : i32
    %c8_i32_39 = arith.constant 8 : i32
    %100 = arith.muli %97, %c8_i32_39 : i32
    %101 = tpu.assume_multiple %100, 8 : i32
    %102 = arith.index_cast %99 : i32 to index
    %c0_40 = arith.constant 0 : index
    %103 = vector.load %arg10[%102, %c0_40] : memref<64x96xf32, #tpu.memory_space<vmem>>, vector<8x96xf32>
    %104 = arith.index_cast %101 : i32 to index
    %c0_41 = arith.constant 0 : index
    %105 = vector.load %arg11[%104, %c0_41] : memref<64x96xf32, #tpu.memory_space<vmem>>, vector<8x96xf32>
    %106 = arith.truncf %61 : vector<8x32xf32> to vector<8x32xbf16>
    %cst_42 = arith.constant dense<0.000000e+00> : vector<8x96xf32>
    %107 = tpu.matmul %106, %13, %cst_42 {dimension_numbers = #tpu.dot_dimension_numbers<[1], [0], [0], [1], [0, 0, 1, 1], [], []>} : vector<8x32xbf16>, vector<32x96xbf16>, vector<8x96xf32> -> vector<8x96xf32>
    %108 = arith.truncf %88 : vector<8x32xf32> to vector<8x32xbf16>
    %cst_43 = arith.constant dense<0.000000e+00> : vector<8x96xf32>
    %109 = tpu.matmul %108, %14, %cst_43 {dimension_numbers = #tpu.dot_dimension_numbers<[1], [0], [0], [1], [0, 0, 1, 1], [], []>} : vector<8x32xbf16>, vector<32x96xbf16>, vector<8x96xf32> -> vector<8x96xf32>
    %110 = vector.extract_strided_slice %103 {offsets = [0, 0], sizes = [8, 32], strides = [1, 1]} : vector<8x96xf32> to vector<8x32xf32>
    %111 = vector.extract_strided_slice %107 {offsets = [0, 0], sizes = [8, 32], strides = [1, 1]} : vector<8x96xf32> to vector<8x32xf32>
    %112 = arith.addf %110, %111 : vector<8x32xf32>
    %113 = arith.negf %112 : vector<8x32xf32>
    %114 = math.exp %113 : vector<8x32xf32>
    %cst_44 = arith.constant 1.000000e+00 : f32
    %115 = vector.broadcast %cst_44 : f32 to vector<8x32xf32>
    %116 = arith.addf %115, %114 : vector<8x32xf32>
    %117 = arith.divf %115, %116 : vector<8x32xf32>
    %118 = vector.extract_strided_slice %103 {offsets = [0, 32], sizes = [8, 32], strides = [1, 1]} : vector<8x96xf32> to vector<8x32xf32>
    %119 = vector.extract_strided_slice %107 {offsets = [0, 32], sizes = [8, 32], strides = [1, 1]} : vector<8x96xf32> to vector<8x32xf32>
    %120 = arith.addf %118, %119 : vector<8x32xf32>
    %121 = arith.negf %120 : vector<8x32xf32>
    %122 = math.exp %121 : vector<8x32xf32>
    %cst_45 = arith.constant 1.000000e+00 : f32
    %123 = vector.broadcast %cst_45 : f32 to vector<8x32xf32>
    %124 = arith.addf %123, %122 : vector<8x32xf32>
    %125 = arith.divf %123, %124 : vector<8x32xf32>
    %126 = vector.extract_strided_slice %103 {offsets = [0, 64], sizes = [8, 32], strides = [1, 1]} : vector<8x96xf32> to vector<8x32xf32>
    %127 = vector.extract_strided_slice %107 {offsets = [0, 64], sizes = [8, 32], strides = [1, 1]} : vector<8x96xf32> to vector<8x32xf32>
    %128 = arith.addf %127, %17 : vector<8x32xf32>
    %129 = arith.mulf %117, %128 : vector<8x32xf32>
    %130 = arith.addf %126, %129 : vector<8x32xf32>
    %131 = math.tanh %130 : vector<8x32xf32>
    %cst_46 = arith.constant 1.000000e+00 : f32
    %132 = vector.broadcast %cst_46 : f32 to vector<8x32xf32>
    %133 = arith.subf %132, %125 : vector<8x32xf32>
    %134 = arith.mulf %133, %131 : vector<8x32xf32>
    %135 = arith.mulf %125, %61 : vector<8x32xf32>
    %136 = arith.addf %134, %135 : vector<8x32xf32>
    %137 = vector.extract_strided_slice %105 {offsets = [0, 0], sizes = [8, 32], strides = [1, 1]} : vector<8x96xf32> to vector<8x32xf32>
    %138 = vector.extract_strided_slice %109 {offsets = [0, 0], sizes = [8, 32], strides = [1, 1]} : vector<8x96xf32> to vector<8x32xf32>
    %139 = arith.addf %137, %138 : vector<8x32xf32>
    %140 = arith.negf %139 : vector<8x32xf32>
    %141 = math.exp %140 : vector<8x32xf32>
    %cst_47 = arith.constant 1.000000e+00 : f32
    %142 = vector.broadcast %cst_47 : f32 to vector<8x32xf32>
    %143 = arith.addf %142, %141 : vector<8x32xf32>
    %144 = arith.divf %142, %143 : vector<8x32xf32>
    %145 = vector.extract_strided_slice %105 {offsets = [0, 32], sizes = [8, 32], strides = [1, 1]} : vector<8x96xf32> to vector<8x32xf32>
    %146 = vector.extract_strided_slice %109 {offsets = [0, 32], sizes = [8, 32], strides = [1, 1]} : vector<8x96xf32> to vector<8x32xf32>
    %147 = arith.addf %145, %146 : vector<8x32xf32>
    %148 = arith.negf %147 : vector<8x32xf32>
    %149 = math.exp %148 : vector<8x32xf32>
    %cst_48 = arith.constant 1.000000e+00 : f32
    %150 = vector.broadcast %cst_48 : f32 to vector<8x32xf32>
    %151 = arith.addf %150, %149 : vector<8x32xf32>
    %152 = arith.divf %150, %151 : vector<8x32xf32>
    %153 = vector.extract_strided_slice %105 {offsets = [0, 64], sizes = [8, 32], strides = [1, 1]} : vector<8x96xf32> to vector<8x32xf32>
    %154 = vector.extract_strided_slice %109 {offsets = [0, 64], sizes = [8, 32], strides = [1, 1]} : vector<8x96xf32> to vector<8x32xf32>
    %155 = arith.addf %154, %20 : vector<8x32xf32>
    %156 = arith.mulf %144, %155 : vector<8x32xf32>
    %157 = arith.addf %153, %156 : vector<8x32xf32>
    %158 = math.tanh %157 : vector<8x32xf32>
    %cst_49 = arith.constant 1.000000e+00 : f32
    %159 = vector.broadcast %cst_49 : f32 to vector<8x32xf32>
    %160 = arith.subf %159, %152 : vector<8x32xf32>
    %161 = arith.mulf %160, %158 : vector<8x32xf32>
    %162 = arith.mulf %152, %88 : vector<8x32xf32>
    %163 = arith.addf %161, %162 : vector<8x32xf32>
    %164 = arith.index_cast %c1_i32 : i32 to index
    %c0_50 = arith.constant 0 : index
    %c0_51 = arith.constant 0 : index
    %165 = vector.load %arg9[%164, %c0_50, %c0_51] : memref<8x8x64xf32, #tpu.memory_space<vmem>>, vector<1x8x32xf32>
    %166 = vector.shape_cast %165 : vector<1x8x32xf32> to vector<8x32xf32>
    %167 = vector.shape_cast %136 : vector<8x32xf32> to vector<1x8x32xf32>
    tpu.vector_store %arg9[%164, %c0_50, %c0_51], %167 {strides = array<i32>} : memref<8x8x64xf32, #tpu.memory_space<vmem>>, vector<1x8x32xf32>,
    %168 = arith.index_cast %97 : i32 to index
    %c0_52 = arith.constant 0 : index
    %c32_53 = arith.constant 32 : index
    %169 = vector.load %arg9[%168, %c0_52, %c32_53] : memref<8x8x64xf32, #tpu.memory_space<vmem>>, vector<1x8x32xf32>
    %170 = vector.shape_cast %169 : vector<1x8x32xf32> to vector<8x32xf32>
    %171 = vector.shape_cast %163 : vector<8x32xf32> to vector<1x8x32xf32>
    tpu.vector_store %arg9[%168, %c0_52, %c32_53], %171 {strides = array<i32>} : memref<8x8x64xf32, #tpu.memory_space<vmem>>, vector<1x8x32xf32>,
    %c2_i32 = arith.constant 2 : i32
    %c7_i32_54 = arith.constant 7 : i32
    %172 = arith.subi %c7_i32_54, %c2_i32 : i32
    %c8_i32_55 = arith.constant 8 : i32
    %173 = arith.muli %c2_i32, %c8_i32_55 : i32
    %174 = tpu.assume_multiple %173, 8 : i32
    %c8_i32_56 = arith.constant 8 : i32
    %175 = arith.muli %172, %c8_i32_56 : i32
    %176 = tpu.assume_multiple %175, 8 : i32
    %177 = arith.index_cast %174 : i32 to index
    %c0_57 = arith.constant 0 : index
    %178 = vector.load %arg10[%177, %c0_57] : memref<64x96xf32, #tpu.memory_space<vmem>>, vector<8x96xf32>
    %179 = arith.index_cast %176 : i32 to index
    %c0_58 = arith.constant 0 : index
    %180 = vector.load %arg11[%179, %c0_58] : memref<64x96xf32, #tpu.memory_space<vmem>>, vector<8x96xf32>
    %181 = arith.truncf %136 : vector<8x32xf32> to vector<8x32xbf16>
    %cst_59 = arith.constant dense<0.000000e+00> : vector<8x96xf32>
    %182 = tpu.matmul %181, %13, %cst_59 {dimension_numbers = #tpu.dot_dimension_numbers<[1], [0], [0], [1], [0, 0, 1, 1], [], []>} : vector<8x32xbf16>, vector<32x96xbf16>, vector<8x96xf32> -> vector<8x96xf32>
    %183 = arith.truncf %163 : vector<8x32xf32> to vector<8x32xbf16>
    %cst_60 = arith.constant dense<0.000000e+00> : vector<8x96xf32>
    %184 = tpu.matmul %183, %14, %cst_60 {dimension_numbers = #tpu.dot_dimension_numbers<[1], [0], [0], [1], [0, 0, 1, 1], [], []>} : vector<8x32xbf16>, vector<32x96xbf16>, vector<8x96xf32> -> vector<8x96xf32>
    %185 = vector.extract_strided_slice %178 {offsets = [0, 0], sizes = [8, 32], strides = [1, 1]} : vector<8x96xf32> to vector<8x32xf32>
    %186 = vector.extract_strided_slice %182 {offsets = [0, 0], sizes = [8, 32], strides = [1, 1]} : vector<8x96xf32> to vector<8x32xf32>
    %187 = arith.addf %185, %186 : vector<8x32xf32>
    %188 = arith.negf %187 : vector<8x32xf32>
    %189 = math.exp %188 : vector<8x32xf32>
    %cst_61 = arith.constant 1.000000e+00 : f32
    %190 = vector.broadcast %cst_61 : f32 to vector<8x32xf32>
    %191 = arith.addf %190, %189 : vector<8x32xf32>
    %192 = arith.divf %190, %191 : vector<8x32xf32>
    %193 = vector.extract_strided_slice %178 {offsets = [0, 32], sizes = [8, 32], strides = [1, 1]} : vector<8x96xf32> to vector<8x32xf32>
    %194 = vector.extract_strided_slice %182 {offsets = [0, 32], sizes = [8, 32], strides = [1, 1]} : vector<8x96xf32> to vector<8x32xf32>
    %195 = arith.addf %193, %194 : vector<8x32xf32>
    %196 = arith.negf %195 : vector<8x32xf32>
    %197 = math.exp %196 : vector<8x32xf32>
    %cst_62 = arith.constant 1.000000e+00 : f32
    %198 = vector.broadcast %cst_62 : f32 to vector<8x32xf32>
    %199 = arith.addf %198, %197 : vector<8x32xf32>
    %200 = arith.divf %198, %199 : vector<8x32xf32>
    %201 = vector.extract_strided_slice %178 {offsets = [0, 64], sizes = [8, 32], strides = [1, 1]} : vector<8x96xf32> to vector<8x32xf32>
    %202 = vector.extract_strided_slice %182 {offsets = [0, 64], sizes = [8, 32], strides = [1, 1]} : vector<8x96xf32> to vector<8x32xf32>
    %203 = arith.addf %202, %17 : vector<8x32xf32>
    %204 = arith.mulf %192, %203 : vector<8x32xf32>
    %205 = arith.addf %201, %204 : vector<8x32xf32>
    %206 = math.tanh %205 : vector<8x32xf32>
    %cst_63 = arith.constant 1.000000e+00 : f32
    %207 = vector.broadcast %cst_63 : f32 to vector<8x32xf32>
    %208 = arith.subf %207, %200 : vector<8x32xf32>
    %209 = arith.mulf %208, %206 : vector<8x32xf32>
    %210 = arith.mulf %200, %136 : vector<8x32xf32>
    %211 = arith.addf %209, %210 : vector<8x32xf32>
    %212 = vector.extract_strided_slice %180 {offsets = [0, 0], sizes = [8, 32], strides = [1, 1]} : vector<8x96xf32> to vector<8x32xf32>
    %213 = vector.extract_strided_slice %184 {offsets = [0, 0], sizes = [8, 32], strides = [1, 1]} : vector<8x96xf32> to vector<8x32xf32>
    %214 = arith.addf %212, %213 : vector<8x32xf32>
    %215 = arith.negf %214 : vector<8x32xf32>
    %216 = math.exp %215 : vector<8x32xf32>
    %cst_64 = arith.constant 1.000000e+00 : f32
    %217 = vector.broadcast %cst_64 : f32 to vector<8x32xf32>
    %218 = arith.addf %217, %216 : vector<8x32xf32>
    %219 = arith.divf %217, %218 : vector<8x32xf32>
    %220 = vector.extract_strided_slice %180 {offsets = [0, 32], sizes = [8, 32], strides = [1, 1]} : vector<8x96xf32> to vector<8x32xf32>
    %221 = vector.extract_strided_slice %184 {offsets = [0, 32], sizes = [8, 32], strides = [1, 1]} : vector<8x96xf32> to vector<8x32xf32>
    %222 = arith.addf %220, %221 : vector<8x32xf32>
    %223 = arith.negf %222 : vector<8x32xf32>
    %224 = math.exp %223 : vector<8x32xf32>
    %cst_65 = arith.constant 1.000000e+00 : f32
    %225 = vector.broadcast %cst_65 : f32 to vector<8x32xf32>
    %226 = arith.addf %225, %224 : vector<8x32xf32>
    %227 = arith.divf %225, %226 : vector<8x32xf32>
    %228 = vector.extract_strided_slice %180 {offsets = [0, 64], sizes = [8, 32], strides = [1, 1]} : vector<8x96xf32> to vector<8x32xf32>
    %229 = vector.extract_strided_slice %184 {offsets = [0, 64], sizes = [8, 32], strides = [1, 1]} : vector<8x96xf32> to vector<8x32xf32>
    %230 = arith.addf %229, %20 : vector<8x32xf32>
    %231 = arith.mulf %219, %230 : vector<8x32xf32>
    %232 = arith.addf %228, %231 : vector<8x32xf32>
    %233 = math.tanh %232 : vector<8x32xf32>
    %cst_66 = arith.constant 1.000000e+00 : f32
    %234 = vector.broadcast %cst_66 : f32 to vector<8x32xf32>
    %235 = arith.subf %234, %227 : vector<8x32xf32>
    %236 = arith.mulf %235, %233 : vector<8x32xf32>
    %237 = arith.mulf %227, %163 : vector<8x32xf32>
    %238 = arith.addf %236, %237 : vector<8x32xf32>
    %239 = arith.index_cast %c2_i32 : i32 to index
    %c0_67 = arith.constant 0 : index
    %c0_68 = arith.constant 0 : index
    %240 = vector.load %arg9[%239, %c0_67, %c0_68] : memref<8x8x64xf32, #tpu.memory_space<vmem>>, vector<1x8x32xf32>
    %241 = vector.shape_cast %240 : vector<1x8x32xf32> to vector<8x32xf32>
    %242 = vector.shape_cast %211 : vector<8x32xf32> to vector<1x8x32xf32>
    tpu.vector_store %arg9[%239, %c0_67, %c0_68], %242 {strides = array<i32>} : memref<8x8x64xf32, #tpu.memory_space<vmem>>, vector<1x8x32xf32>,
    %243 = arith.index_cast %172 : i32 to index
    %c0_69 = arith.constant 0 : index
    %c32_70 = arith.constant 32 : index
    %244 = vector.load %arg9[%243, %c0_69, %c32_70] : memref<8x8x64xf32, #tpu.memory_space<vmem>>, vector<1x8x32xf32>
    %245 = vector.shape_cast %244 : vector<1x8x32xf32> to vector<8x32xf32>
    %246 = vector.shape_cast %238 : vector<8x32xf32> to vector<1x8x32xf32>
    tpu.vector_store %arg9[%243, %c0_69, %c32_70], %246 {strides = array<i32>} : memref<8x8x64xf32, #tpu.memory_space<vmem>>, vector<1x8x32xf32>,
    %c3_i32 = arith.constant 3 : i32
    %c7_i32_71 = arith.constant 7 : i32
    %247 = arith.subi %c7_i32_71, %c3_i32 : i32
    %c8_i32_72 = arith.constant 8 : i32
    %248 = arith.muli %c3_i32, %c8_i32_72 : i32
    %249 = tpu.assume_multiple %248, 8 : i32
    %c8_i32_73 = arith.constant 8 : i32
    %250 = arith.muli %247, %c8_i32_73 : i32
    %251 = tpu.assume_multiple %250, 8 : i32
    %252 = arith.index_cast %249 : i32 to index
    %c0_74 = arith.constant 0 : index
    %253 = vector.load %arg10[%252, %c0_74] : memref<64x96xf32, #tpu.memory_space<vmem>>, vector<8x96xf32>
    %254 = arith.index_cast %251 : i32 to index
    %c0_75 = arith.constant 0 : index
    %255 = vector.load %arg11[%254, %c0_75] : memref<64x96xf32, #tpu.memory_space<vmem>>, vector<8x96xf32>
    %256 = arith.truncf %211 : vector<8x32xf32> to vector<8x32xbf16>
    %cst_76 = arith.constant dense<0.000000e+00> : vector<8x96xf32>
    %257 = tpu.matmul %256, %13, %cst_76 {dimension_numbers = #tpu.dot_dimension_numbers<[1], [0], [0], [1], [0, 0, 1, 1], [], []>} : vector<8x32xbf16>, vector<32x96xbf16>, vector<8x96xf32> -> vector<8x96xf32>
    %258 = arith.truncf %238 : vector<8x32xf32> to vector<8x32xbf16>
    %cst_77 = arith.constant dense<0.000000e+00> : vector<8x96xf32>
    %259 = tpu.matmul %258, %14, %cst_77 {dimension_numbers = #tpu.dot_dimension_numbers<[1], [0], [0], [1], [0, 0, 1, 1], [], []>} : vector<8x32xbf16>, vector<32x96xbf16>, vector<8x96xf32> -> vector<8x96xf32>
    %260 = vector.extract_strided_slice %253 {offsets = [0, 0], sizes = [8, 32], strides = [1, 1]} : vector<8x96xf32> to vector<8x32xf32>
    %261 = vector.extract_strided_slice %257 {offsets = [0, 0], sizes = [8, 32], strides = [1, 1]} : vector<8x96xf32> to vector<8x32xf32>
    %262 = arith.addf %260, %261 : vector<8x32xf32>
    %263 = arith.negf %262 : vector<8x32xf32>
    %264 = math.exp %263 : vector<8x32xf32>
    %cst_78 = arith.constant 1.000000e+00 : f32
    %265 = vector.broadcast %cst_78 : f32 to vector<8x32xf32>
    %266 = arith.addf %265, %264 : vector<8x32xf32>
    %267 = arith.divf %265, %266 : vector<8x32xf32>
    %268 = vector.extract_strided_slice %253 {offsets = [0, 32], sizes = [8, 32], strides = [1, 1]} : vector<8x96xf32> to vector<8x32xf32>
    %269 = vector.extract_strided_slice %257 {offsets = [0, 32], sizes = [8, 32], strides = [1, 1]} : vector<8x96xf32> to vector<8x32xf32>
    %270 = arith.addf %268, %269 : vector<8x32xf32>
    %271 = arith.negf %270 : vector<8x32xf32>
    %272 = math.exp %271 : vector<8x32xf32>
    %cst_79 = arith.constant 1.000000e+00 : f32
    %273 = vector.broadcast %cst_79 : f32 to vector<8x32xf32>
    %274 = arith.addf %273, %272 : vector<8x32xf32>
    %275 = arith.divf %273, %274 : vector<8x32xf32>
    %276 = vector.extract_strided_slice %253 {offsets = [0, 64], sizes = [8, 32], strides = [1, 1]} : vector<8x96xf32> to vector<8x32xf32>
    %277 = vector.extract_strided_slice %257 {offsets = [0, 64], sizes = [8, 32], strides = [1, 1]} : vector<8x96xf32> to vector<8x32xf32>
    %278 = arith.addf %277, %17 : vector<8x32xf32>
    %279 = arith.mulf %267, %278 : vector<8x32xf32>
    %280 = arith.addf %276, %279 : vector<8x32xf32>
    %281 = math.tanh %280 : vector<8x32xf32>
    %cst_80 = arith.constant 1.000000e+00 : f32
    %282 = vector.broadcast %cst_80 : f32 to vector<8x32xf32>
    %283 = arith.subf %282, %275 : vector<8x32xf32>
    %284 = arith.mulf %283, %281 : vector<8x32xf32>
    %285 = arith.mulf %275, %211 : vector<8x32xf32>
    %286 = arith.addf %284, %285 : vector<8x32xf32>
    %287 = vector.extract_strided_slice %255 {offsets = [0, 0], sizes = [8, 32], strides = [1, 1]} : vector<8x96xf32> to vector<8x32xf32>
    %288 = vector.extract_strided_slice %259 {offsets = [0, 0], sizes = [8, 32], strides = [1, 1]} : vector<8x96xf32> to vector<8x32xf32>
    %289 = arith.addf %287, %288 : vector<8x32xf32>
    %290 = arith.negf %289 : vector<8x32xf32>
    %291 = math.exp %290 : vector<8x32xf32>
    %cst_81 = arith.constant 1.000000e+00 : f32
    %292 = vector.broadcast %cst_81 : f32 to vector<8x32xf32>
    %293 = arith.addf %292, %291 : vector<8x32xf32>
    %294 = arith.divf %292, %293 : vector<8x32xf32>
    %295 = vector.extract_strided_slice %255 {offsets = [0, 32], sizes = [8, 32], strides = [1, 1]} : vector<8x96xf32> to vector<8x32xf32>
    %296 = vector.extract_strided_slice %259 {offsets = [0, 32], sizes = [8, 32], strides = [1, 1]} : vector<8x96xf32> to vector<8x32xf32>
    %297 = arith.addf %295, %296 : vector<8x32xf32>
    %298 = arith.negf %297 : vector<8x32xf32>
    %299 = math.exp %298 : vector<8x32xf32>
    %cst_82 = arith.constant 1.000000e+00 : f32
    %300 = vector.broadcast %cst_82 : f32 to vector<8x32xf32>
    %301 = arith.addf %300, %299 : vector<8x32xf32>
    %302 = arith.divf %300, %301 : vector<8x32xf32>
    %303 = vector.extract_strided_slice %255 {offsets = [0, 64], sizes = [8, 32], strides = [1, 1]} : vector<8x96xf32> to vector<8x32xf32>
    %304 = vector.extract_strided_slice %259 {offsets = [0, 64], sizes = [8, 32], strides = [1, 1]} : vector<8x96xf32> to vector<8x32xf32>
    %305 = arith.addf %304, %20 : vector<8x32xf32>
    %306 = arith.mulf %294, %305 : vector<8x32xf32>
    %307 = arith.addf %303, %306 : vector<8x32xf32>
    %308 = math.tanh %307 : vector<8x32xf32>
    %cst_83 = arith.constant 1.000000e+00 : f32
    %309 = vector.broadcast %cst_83 : f32 to vector<8x32xf32>
    %310 = arith.subf %309, %302 : vector<8x32xf32>
    %311 = arith.mulf %310, %308 : vector<8x32xf32>
    %312 = arith.mulf %302, %238 : vector<8x32xf32>
    %313 = arith.addf %311, %312 : vector<8x32xf32>
    %314 = arith.index_cast %c3_i32 : i32 to index
    %c0_84 = arith.constant 0 : index
    %c0_85 = arith.constant 0 : index
    %315 = vector.load %arg9[%314, %c0_84, %c0_85] : memref<8x8x64xf32, #tpu.memory_space<vmem>>, vector<1x8x32xf32>
    %316 = vector.shape_cast %315 : vector<1x8x32xf32> to vector<8x32xf32>
    %317 = vector.shape_cast %286 : vector<8x32xf32> to vector<1x8x32xf32>
    tpu.vector_store %arg9[%314, %c0_84, %c0_85], %317 {strides = array<i32>} : memref<8x8x64xf32, #tpu.memory_space<vmem>>, vector<1x8x32xf32>,
    %318 = arith.index_cast %247 : i32 to index
    %c0_86 = arith.constant 0 : index
    %c32_87 = arith.constant 32 : index
    %319 = vector.load %arg9[%318, %c0_86, %c32_87] : memref<8x8x64xf32, #tpu.memory_space<vmem>>, vector<1x8x32xf32>
    %320 = vector.shape_cast %319 : vector<1x8x32xf32> to vector<8x32xf32>
    %321 = vector.shape_cast %313 : vector<8x32xf32> to vector<1x8x32xf32>
    tpu.vector_store %arg9[%318, %c0_86, %c32_87], %321 {strides = array<i32>} : memref<8x8x64xf32, #tpu.memory_space<vmem>>, vector<1x8x32xf32>,
    %c4_i32 = arith.constant 4 : i32
    %c7_i32_88 = arith.constant 7 : i32
    %322 = arith.subi %c7_i32_88, %c4_i32 : i32
    %c8_i32_89 = arith.constant 8 : i32
    %323 = arith.muli %c4_i32, %c8_i32_89 : i32
    %324 = tpu.assume_multiple %323, 8 : i32
    %c8_i32_90 = arith.constant 8 : i32
    %325 = arith.muli %322, %c8_i32_90 : i32
    %326 = tpu.assume_multiple %325, 8 : i32
    %327 = arith.index_cast %324 : i32 to index
    %c0_91 = arith.constant 0 : index
    %328 = vector.load %arg10[%327, %c0_91] : memref<64x96xf32, #tpu.memory_space<vmem>>, vector<8x96xf32>
    %329 = arith.index_cast %326 : i32 to index
    %c0_92 = arith.constant 0 : index
    %330 = vector.load %arg11[%329, %c0_92] : memref<64x96xf32, #tpu.memory_space<vmem>>, vector<8x96xf32>
    %331 = arith.truncf %286 : vector<8x32xf32> to vector<8x32xbf16>
    %cst_93 = arith.constant dense<0.000000e+00> : vector<8x96xf32>
    %332 = tpu.matmul %331, %13, %cst_93 {dimension_numbers = #tpu.dot_dimension_numbers<[1], [0], [0], [1], [0, 0, 1, 1], [], []>} : vector<8x32xbf16>, vector<32x96xbf16>, vector<8x96xf32> -> vector<8x96xf32>
    %333 = arith.truncf %313 : vector<8x32xf32> to vector<8x32xbf16>
    %cst_94 = arith.constant dense<0.000000e+00> : vector<8x96xf32>
    %334 = tpu.matmul %333, %14, %cst_94 {dimension_numbers = #tpu.dot_dimension_numbers<[1], [0], [0], [1], [0, 0, 1, 1], [], []>} : vector<8x32xbf16>, vector<32x96xbf16>, vector<8x96xf32> -> vector<8x96xf32>
    %335 = vector.extract_strided_slice %328 {offsets = [0, 0], sizes = [8, 32], strides = [1, 1]} : vector<8x96xf32> to vector<8x32xf32>
    %336 = vector.extract_strided_slice %332 {offsets = [0, 0], sizes = [8, 32], strides = [1, 1]} : vector<8x96xf32> to vector<8x32xf32>
    %337 = arith.addf %335, %336 : vector<8x32xf32>
    %338 = arith.negf %337 : vector<8x32xf32>
    %339 = math.exp %338 : vector<8x32xf32>
    %cst_95 = arith.constant 1.000000e+00 : f32
    %340 = vector.broadcast %cst_95 : f32 to vector<8x32xf32>
    %341 = arith.addf %340, %339 : vector<8x32xf32>
    %342 = arith.divf %340, %341 : vector<8x32xf32>
    %343 = vector.extract_strided_slice %328 {offsets = [0, 32], sizes = [8, 32], strides = [1, 1]} : vector<8x96xf32> to vector<8x32xf32>
    %344 = vector.extract_strided_slice %332 {offsets = [0, 32], sizes = [8, 32], strides = [1, 1]} : vector<8x96xf32> to vector<8x32xf32>
    %345 = arith.addf %343, %344 : vector<8x32xf32>
    %346 = arith.negf %345 : vector<8x32xf32>
    %347 = math.exp %346 : vector<8x32xf32>
    %cst_96 = arith.constant 1.000000e+00 : f32
    %348 = vector.broadcast %cst_96 : f32 to vector<8x32xf32>
    %349 = arith.addf %348, %347 : vector<8x32xf32>
    %350 = arith.divf %348, %349 : vector<8x32xf32>
    %351 = vector.extract_strided_slice %328 {offsets = [0, 64], sizes = [8, 32], strides = [1, 1]} : vector<8x96xf32> to vector<8x32xf32>
    %352 = vector.extract_strided_slice %332 {offsets = [0, 64], sizes = [8, 32], strides = [1, 1]} : vector<8x96xf32> to vector<8x32xf32>
    %353 = arith.addf %352, %17 : vector<8x32xf32>
    %354 = arith.mulf %342, %353 : vector<8x32xf32>
    %355 = arith.addf %351, %354 : vector<8x32xf32>
    %356 = math.tanh %355 : vector<8x32xf32>
    %cst_97 = arith.constant 1.000000e+00 : f32
    %357 = vector.broadcast %cst_97 : f32 to vector<8x32xf32>
    %358 = arith.subf %357, %350 : vector<8x32xf32>
    %359 = arith.mulf %358, %356 : vector<8x32xf32>
    %360 = arith.mulf %350, %286 : vector<8x32xf32>
    %361 = arith.addf %359, %360 : vector<8x32xf32>
    %362 = vector.extract_strided_slice %330 {offsets = [0, 0], sizes = [8, 32], strides = [1, 1]} : vector<8x96xf32> to vector<8x32xf32>
    %363 = vector.extract_strided_slice %334 {offsets = [0, 0], sizes = [8, 32], strides = [1, 1]} : vector<8x96xf32> to vector<8x32xf32>
    %364 = arith.addf %362, %363 : vector<8x32xf32>
    %365 = arith.negf %364 : vector<8x32xf32>
    %366 = math.exp %365 : vector<8x32xf32>
    %cst_98 = arith.constant 1.000000e+00 : f32
    %367 = vector.broadcast %cst_98 : f32 to vector<8x32xf32>
    %368 = arith.addf %367, %366 : vector<8x32xf32>
    %369 = arith.divf %367, %368 : vector<8x32xf32>
    %370 = vector.extract_strided_slice %330 {offsets = [0, 32], sizes = [8, 32], strides = [1, 1]} : vector<8x96xf32> to vector<8x32xf32>
    %371 = vector.extract_strided_slice %334 {offsets = [0, 32], sizes = [8, 32], strides = [1, 1]} : vector<8x96xf32> to vector<8x32xf32>
    %372 = arith.addf %370, %371 : vector<8x32xf32>
    %373 = arith.negf %372 : vector<8x32xf32>
    %374 = math.exp %373 : vector<8x32xf32>
    %cst_99 = arith.constant 1.000000e+00 : f32
    %375 = vector.broadcast %cst_99 : f32 to vector<8x32xf32>
    %376 = arith.addf %375, %374 : vector<8x32xf32>
    %377 = arith.divf %375, %376 : vector<8x32xf32>
    %378 = vector.extract_strided_slice %330 {offsets = [0, 64], sizes = [8, 32], strides = [1, 1]} : vector<8x96xf32> to vector<8x32xf32>
    %379 = vector.extract_strided_slice %334 {offsets = [0, 64], sizes = [8, 32], strides = [1, 1]} : vector<8x96xf32> to vector<8x32xf32>
    %380 = arith.addf %379, %20 : vector<8x32xf32>
    %381 = arith.mulf %369, %380 : vector<8x32xf32>
    %382 = arith.addf %378, %381 : vector<8x32xf32>
    %383 = math.tanh %382 : vector<8x32xf32>
    %cst_100 = arith.constant 1.000000e+00 : f32
    %384 = vector.broadcast %cst_100 : f32 to vector<8x32xf32>
    %385 = arith.subf %384, %377 : vector<8x32xf32>
    %386 = arith.mulf %385, %383 : vector<8x32xf32>
    %387 = arith.mulf %377, %313 : vector<8x32xf32>
    %388 = arith.addf %386, %387 : vector<8x32xf32>
    %389 = arith.index_cast %c4_i32 : i32 to index
    %c0_101 = arith.constant 0 : index
    %c0_102 = arith.constant 0 : index
    %390 = vector.load %arg9[%389, %c0_101, %c0_102] : memref<8x8x64xf32, #tpu.memory_space<vmem>>, vector<1x8x32xf32>
    %391 = vector.shape_cast %390 : vector<1x8x32xf32> to vector<8x32xf32>
    %392 = vector.shape_cast %361 : vector<8x32xf32> to vector<1x8x32xf32>
    tpu.vector_store %arg9[%389, %c0_101, %c0_102], %392 {strides = array<i32>} : memref<8x8x64xf32, #tpu.memory_space<vmem>>, vector<1x8x32xf32>,
    %393 = arith.index_cast %322 : i32 to index
    %c0_103 = arith.constant 0 : index
    %c32_104 = arith.constant 32 : index
    %394 = vector.load %arg9[%393, %c0_103, %c32_104] : memref<8x8x64xf32, #tpu.memory_space<vmem>>, vector<1x8x32xf32>
    %395 = vector.shape_cast %394 : vector<1x8x32xf32> to vector<8x32xf32>
    %396 = vector.shape_cast %388 : vector<8x32xf32> to vector<1x8x32xf32>
    tpu.vector_store %arg9[%393, %c0_103, %c32_104], %396 {strides = array<i32>} : memref<8x8x64xf32, #tpu.memory_space<vmem>>, vector<1x8x32xf32>,
    %c5_i32 = arith.constant 5 : i32
    %c7_i32_105 = arith.constant 7 : i32
    %397 = arith.subi %c7_i32_105, %c5_i32 : i32
    %c8_i32_106 = arith.constant 8 : i32
    %398 = arith.muli %c5_i32, %c8_i32_106 : i32
    %399 = tpu.assume_multiple %398, 8 : i32
    %c8_i32_107 = arith.constant 8 : i32
    %400 = arith.muli %397, %c8_i32_107 : i32
    %401 = tpu.assume_multiple %400, 8 : i32
    %402 = arith.index_cast %399 : i32 to index
    %c0_108 = arith.constant 0 : index
    %403 = vector.load %arg10[%402, %c0_108] : memref<64x96xf32, #tpu.memory_space<vmem>>, vector<8x96xf32>
    %404 = arith.index_cast %401 : i32 to index
    %c0_109 = arith.constant 0 : index
    %405 = vector.load %arg11[%404, %c0_109] : memref<64x96xf32, #tpu.memory_space<vmem>>, vector<8x96xf32>
    %406 = arith.truncf %361 : vector<8x32xf32> to vector<8x32xbf16>
    %cst_110 = arith.constant dense<0.000000e+00> : vector<8x96xf32>
    %407 = tpu.matmul %406, %13, %cst_110 {dimension_numbers = #tpu.dot_dimension_numbers<[1], [0], [0], [1], [0, 0, 1, 1], [], []>} : vector<8x32xbf16>, vector<32x96xbf16>, vector<8x96xf32> -> vector<8x96xf32>
    %408 = arith.truncf %388 : vector<8x32xf32> to vector<8x32xbf16>
    %cst_111 = arith.constant dense<0.000000e+00> : vector<8x96xf32>
    %409 = tpu.matmul %408, %14, %cst_111 {dimension_numbers = #tpu.dot_dimension_numbers<[1], [0], [0], [1], [0, 0, 1, 1], [], []>} : vector<8x32xbf16>, vector<32x96xbf16>, vector<8x96xf32> -> vector<8x96xf32>
    %410 = vector.extract_strided_slice %403 {offsets = [0, 0], sizes = [8, 32], strides = [1, 1]} : vector<8x96xf32> to vector<8x32xf32>
    %411 = vector.extract_strided_slice %407 {offsets = [0, 0], sizes = [8, 32], strides = [1, 1]} : vector<8x96xf32> to vector<8x32xf32>
    %412 = arith.addf %410, %411 : vector<8x32xf32>
    %413 = arith.negf %412 : vector<8x32xf32>
    %414 = math.exp %413 : vector<8x32xf32>
    %cst_112 = arith.constant 1.000000e+00 : f32
    %415 = vector.broadcast %cst_112 : f32 to vector<8x32xf32>
    %416 = arith.addf %415, %414 : vector<8x32xf32>
    %417 = arith.divf %415, %416 : vector<8x32xf32>
    %418 = vector.extract_strided_slice %403 {offsets = [0, 32], sizes = [8, 32], strides = [1, 1]} : vector<8x96xf32> to vector<8x32xf32>
    %419 = vector.extract_strided_slice %407 {offsets = [0, 32], sizes = [8, 32], strides = [1, 1]} : vector<8x96xf32> to vector<8x32xf32>
    %420 = arith.addf %418, %419 : vector<8x32xf32>
    %421 = arith.negf %420 : vector<8x32xf32>
    %422 = math.exp %421 : vector<8x32xf32>
    %cst_113 = arith.constant 1.000000e+00 : f32
    %423 = vector.broadcast %cst_113 : f32 to vector<8x32xf32>
    %424 = arith.addf %423, %422 : vector<8x32xf32>
    %425 = arith.divf %423, %424 : vector<8x32xf32>
    %426 = vector.extract_strided_slice %403 {offsets = [0, 64], sizes = [8, 32], strides = [1, 1]} : vector<8x96xf32> to vector<8x32xf32>
    %427 = vector.extract_strided_slice %407 {offsets = [0, 64], sizes = [8, 32], strides = [1, 1]} : vector<8x96xf32> to vector<8x32xf32>
    %428 = arith.addf %427, %17 : vector<8x32xf32>
    %429 = arith.mulf %417, %428 : vector<8x32xf32>
    %430 = arith.addf %426, %429 : vector<8x32xf32>
    %431 = math.tanh %430 : vector<8x32xf32>
    %cst_114 = arith.constant 1.000000e+00 : f32
    %432 = vector.broadcast %cst_114 : f32 to vector<8x32xf32>
    %433 = arith.subf %432, %425 : vector<8x32xf32>
    %434 = arith.mulf %433, %431 : vector<8x32xf32>
    %435 = arith.mulf %425, %361 : vector<8x32xf32>
    %436 = arith.addf %434, %435 : vector<8x32xf32>
    %437 = vector.extract_strided_slice %405 {offsets = [0, 0], sizes = [8, 32], strides = [1, 1]} : vector<8x96xf32> to vector<8x32xf32>
    %438 = vector.extract_strided_slice %409 {offsets = [0, 0], sizes = [8, 32], strides = [1, 1]} : vector<8x96xf32> to vector<8x32xf32>
    %439 = arith.addf %437, %438 : vector<8x32xf32>
    %440 = arith.negf %439 : vector<8x32xf32>
    %441 = math.exp %440 : vector<8x32xf32>
    %cst_115 = arith.constant 1.000000e+00 : f32
    %442 = vector.broadcast %cst_115 : f32 to vector<8x32xf32>
    %443 = arith.addf %442, %441 : vector<8x32xf32>
    %444 = arith.divf %442, %443 : vector<8x32xf32>
    %445 = vector.extract_strided_slice %405 {offsets = [0, 32], sizes = [8, 32], strides = [1, 1]} : vector<8x96xf32> to vector<8x32xf32>
    %446 = vector.extract_strided_slice %409 {offsets = [0, 32], sizes = [8, 32], strides = [1, 1]} : vector<8x96xf32> to vector<8x32xf32>
    %447 = arith.addf %445, %446 : vector<8x32xf32>
    %448 = arith.negf %447 : vector<8x32xf32>
    %449 = math.exp %448 : vector<8x32xf32>
    %cst_116 = arith.constant 1.000000e+00 : f32
    %450 = vector.broadcast %cst_116 : f32 to vector<8x32xf32>
    %451 = arith.addf %450, %449 : vector<8x32xf32>
    %452 = arith.divf %450, %451 : vector<8x32xf32>
    %453 = vector.extract_strided_slice %405 {offsets = [0, 64], sizes = [8, 32], strides = [1, 1]} : vector<8x96xf32> to vector<8x32xf32>
    %454 = vector.extract_strided_slice %409 {offsets = [0, 64], sizes = [8, 32], strides = [1, 1]} : vector<8x96xf32> to vector<8x32xf32>
    %455 = arith.addf %454, %20 : vector<8x32xf32>
    %456 = arith.mulf %444, %455 : vector<8x32xf32>
    %457 = arith.addf %453, %456 : vector<8x32xf32>
    %458 = math.tanh %457 : vector<8x32xf32>
    %cst_117 = arith.constant 1.000000e+00 : f32
    %459 = vector.broadcast %cst_117 : f32 to vector<8x32xf32>
    %460 = arith.subf %459, %452 : vector<8x32xf32>
    %461 = arith.mulf %460, %458 : vector<8x32xf32>
    %462 = arith.mulf %452, %388 : vector<8x32xf32>
    %463 = arith.addf %461, %462 : vector<8x32xf32>
    %464 = arith.index_cast %c5_i32 : i32 to index
    %c0_118 = arith.constant 0 : index
    %c0_119 = arith.constant 0 : index
    %465 = vector.load %arg9[%464, %c0_118, %c0_119] : memref<8x8x64xf32, #tpu.memory_space<vmem>>, vector<1x8x32xf32>
    %466 = vector.shape_cast %465 : vector<1x8x32xf32> to vector<8x32xf32>
    %467 = vector.shape_cast %436 : vector<8x32xf32> to vector<1x8x32xf32>
    tpu.vector_store %arg9[%464, %c0_118, %c0_119], %467 {strides = array<i32>} : memref<8x8x64xf32, #tpu.memory_space<vmem>>, vector<1x8x32xf32>,
    %468 = arith.index_cast %397 : i32 to index
    %c0_120 = arith.constant 0 : index
    %c32_121 = arith.constant 32 : index
    %469 = vector.load %arg9[%468, %c0_120, %c32_121] : memref<8x8x64xf32, #tpu.memory_space<vmem>>, vector<1x8x32xf32>
    %470 = vector.shape_cast %469 : vector<1x8x32xf32> to vector<8x32xf32>
    %471 = vector.shape_cast %463 : vector<8x32xf32> to vector<1x8x32xf32>
    tpu.vector_store %arg9[%468, %c0_120, %c32_121], %471 {strides = array<i32>} : memref<8x8x64xf32, #tpu.memory_space<vmem>>, vector<1x8x32xf32>,
    %c6_i32 = arith.constant 6 : i32
    %c7_i32_122 = arith.constant 7 : i32
    %472 = arith.subi %c7_i32_122, %c6_i32 : i32
    %c8_i32_123 = arith.constant 8 : i32
    %473 = arith.muli %c6_i32, %c8_i32_123 : i32
    %474 = tpu.assume_multiple %473, 8 : i32
    %c8_i32_124 = arith.constant 8 : i32
    %475 = arith.muli %472, %c8_i32_124 : i32
    %476 = tpu.assume_multiple %475, 8 : i32
    %477 = arith.index_cast %474 : i32 to index
    %c0_125 = arith.constant 0 : index
    %478 = vector.load %arg10[%477, %c0_125] : memref<64x96xf32, #tpu.memory_space<vmem>>, vector<8x96xf32>
    %479 = arith.index_cast %476 : i32 to index
    %c0_126 = arith.constant 0 : index
    %480 = vector.load %arg11[%479, %c0_126] : memref<64x96xf32, #tpu.memory_space<vmem>>, vector<8x96xf32>
    %481 = arith.truncf %436 : vector<8x32xf32> to vector<8x32xbf16>
    %cst_127 = arith.constant dense<0.000000e+00> : vector<8x96xf32>
    %482 = tpu.matmul %481, %13, %cst_127 {dimension_numbers = #tpu.dot_dimension_numbers<[1], [0], [0], [1], [0, 0, 1, 1], [], []>} : vector<8x32xbf16>, vector<32x96xbf16>, vector<8x96xf32> -> vector<8x96xf32>
    %483 = arith.truncf %463 : vector<8x32xf32> to vector<8x32xbf16>
    %cst_128 = arith.constant dense<0.000000e+00> : vector<8x96xf32>
    %484 = tpu.matmul %483, %14, %cst_128 {dimension_numbers = #tpu.dot_dimension_numbers<[1], [0], [0], [1], [0, 0, 1, 1], [], []>} : vector<8x32xbf16>, vector<32x96xbf16>, vector<8x96xf32> -> vector<8x96xf32>
    %485 = vector.extract_strided_slice %478 {offsets = [0, 0], sizes = [8, 32], strides = [1, 1]} : vector<8x96xf32> to vector<8x32xf32>
    %486 = vector.extract_strided_slice %482 {offsets = [0, 0], sizes = [8, 32], strides = [1, 1]} : vector<8x96xf32> to vector<8x32xf32>
    %487 = arith.addf %485, %486 : vector<8x32xf32>
    %488 = arith.negf %487 : vector<8x32xf32>
    %489 = math.exp %488 : vector<8x32xf32>
    %cst_129 = arith.constant 1.000000e+00 : f32
    %490 = vector.broadcast %cst_129 : f32 to vector<8x32xf32>
    %491 = arith.addf %490, %489 : vector<8x32xf32>
    %492 = arith.divf %490, %491 : vector<8x32xf32>
    %493 = vector.extract_strided_slice %478 {offsets = [0, 32], sizes = [8, 32], strides = [1, 1]} : vector<8x96xf32> to vector<8x32xf32>
    %494 = vector.extract_strided_slice %482 {offsets = [0, 32], sizes = [8, 32], strides = [1, 1]} : vector<8x96xf32> to vector<8x32xf32>
    %495 = arith.addf %493, %494 : vector<8x32xf32>
    %496 = arith.negf %495 : vector<8x32xf32>
    %497 = math.exp %496 : vector<8x32xf32>
    %cst_130 = arith.constant 1.000000e+00 : f32
    %498 = vector.broadcast %cst_130 : f32 to vector<8x32xf32>
    %499 = arith.addf %498, %497 : vector<8x32xf32>
    %500 = arith.divf %498, %499 : vector<8x32xf32>
    %501 = vector.extract_strided_slice %478 {offsets = [0, 64], sizes = [8, 32], strides = [1, 1]} : vector<8x96xf32> to vector<8x32xf32>
    %502 = vector.extract_strided_slice %482 {offsets = [0, 64], sizes = [8, 32], strides = [1, 1]} : vector<8x96xf32> to vector<8x32xf32>
    %503 = arith.addf %502, %17 : vector<8x32xf32>
    %504 = arith.mulf %492, %503 : vector<8x32xf32>
    %505 = arith.addf %501, %504 : vector<8x32xf32>
    %506 = math.tanh %505 : vector<8x32xf32>
    %cst_131 = arith.constant 1.000000e+00 : f32
    %507 = vector.broadcast %cst_131 : f32 to vector<8x32xf32>
    %508 = arith.subf %507, %500 : vector<8x32xf32>
    %509 = arith.mulf %508, %506 : vector<8x32xf32>
    %510 = arith.mulf %500, %436 : vector<8x32xf32>
    %511 = arith.addf %509, %510 : vector<8x32xf32>
    %512 = vector.extract_strided_slice %480 {offsets = [0, 0], sizes = [8, 32], strides = [1, 1]} : vector<8x96xf32> to vector<8x32xf32>
    %513 = vector.extract_strided_slice %484 {offsets = [0, 0], sizes = [8, 32], strides = [1, 1]} : vector<8x96xf32> to vector<8x32xf32>
    %514 = arith.addf %512, %513 : vector<8x32xf32>
    %515 = arith.negf %514 : vector<8x32xf32>
    %516 = math.exp %515 : vector<8x32xf32>
    %cst_132 = arith.constant 1.000000e+00 : f32
    %517 = vector.broadcast %cst_132 : f32 to vector<8x32xf32>
    %518 = arith.addf %517, %516 : vector<8x32xf32>
    %519 = arith.divf %517, %518 : vector<8x32xf32>
    %520 = vector.extract_strided_slice %480 {offsets = [0, 32], sizes = [8, 32], strides = [1, 1]} : vector<8x96xf32> to vector<8x32xf32>
    %521 = vector.extract_strided_slice %484 {offsets = [0, 32], sizes = [8, 32], strides = [1, 1]} : vector<8x96xf32> to vector<8x32xf32>
    %522 = arith.addf %520, %521 : vector<8x32xf32>
    %523 = arith.negf %522 : vector<8x32xf32>
    %524 = math.exp %523 : vector<8x32xf32>
    %cst_133 = arith.constant 1.000000e+00 : f32
    %525 = vector.broadcast %cst_133 : f32 to vector<8x32xf32>
    %526 = arith.addf %525, %524 : vector<8x32xf32>
    %527 = arith.divf %525, %526 : vector<8x32xf32>
    %528 = vector.extract_strided_slice %480 {offsets = [0, 64], sizes = [8, 32], strides = [1, 1]} : vector<8x96xf32> to vector<8x32xf32>
    %529 = vector.extract_strided_slice %484 {offsets = [0, 64], sizes = [8, 32], strides = [1, 1]} : vector<8x96xf32> to vector<8x32xf32>
    %530 = arith.addf %529, %20 : vector<8x32xf32>
    %531 = arith.mulf %519, %530 : vector<8x32xf32>
    %532 = arith.addf %528, %531 : vector<8x32xf32>
    %533 = math.tanh %532 : vector<8x32xf32>
    %cst_134 = arith.constant 1.000000e+00 : f32
    %534 = vector.broadcast %cst_134 : f32 to vector<8x32xf32>
    %535 = arith.subf %534, %527 : vector<8x32xf32>
    %536 = arith.mulf %535, %533 : vector<8x32xf32>
    %537 = arith.mulf %527, %463 : vector<8x32xf32>
    %538 = arith.addf %536, %537 : vector<8x32xf32>
    %539 = arith.index_cast %c6_i32 : i32 to index
    %c0_135 = arith.constant 0 : index
    %c0_136 = arith.constant 0 : index
    %540 = vector.load %arg9[%539, %c0_135, %c0_136] : memref<8x8x64xf32, #tpu.memory_space<vmem>>, vector<1x8x32xf32>
    %541 = vector.shape_cast %540 : vector<1x8x32xf32> to vector<8x32xf32>
    %542 = vector.shape_cast %511 : vector<8x32xf32> to vector<1x8x32xf32>
    tpu.vector_store %arg9[%539, %c0_135, %c0_136], %542 {strides = array<i32>} : memref<8x8x64xf32, #tpu.memory_space<vmem>>, vector<1x8x32xf32>,
    %543 = arith.index_cast %472 : i32 to index
    %c0_137 = arith.constant 0 : index
    %c32_138 = arith.constant 32 : index
    %544 = vector.load %arg9[%543, %c0_137, %c32_138] : memref<8x8x64xf32, #tpu.memory_space<vmem>>, vector<1x8x32xf32>
    %545 = vector.shape_cast %544 : vector<1x8x32xf32> to vector<8x32xf32>
    %546 = vector.shape_cast %538 : vector<8x32xf32> to vector<1x8x32xf32>
    tpu.vector_store %arg9[%543, %c0_137, %c32_138], %546 {strides = array<i32>} : memref<8x8x64xf32, #tpu.memory_space<vmem>>, vector<1x8x32xf32>,
    %c7_i32_139 = arith.constant 7 : i32
    %c7_i32_140 = arith.constant 7 : i32
    %547 = arith.subi %c7_i32_140, %c7_i32_139 : i32
    %c8_i32_141 = arith.constant 8 : i32
    %548 = arith.muli %c7_i32_139, %c8_i32_141 : i32
    %549 = tpu.assume_multiple %548, 8 : i32
    %c8_i32_142 = arith.constant 8 : i32
    %550 = arith.muli %547, %c8_i32_142 : i32
    %551 = tpu.assume_multiple %550, 8 : i32
    %552 = arith.index_cast %549 : i32 to index
    %c0_143 = arith.constant 0 : index
    %553 = vector.load %arg10[%552, %c0_143] : memref<64x96xf32, #tpu.memory_space<vmem>>, vector<8x96xf32>
    %554 = arith.index_cast %551 : i32 to index
    %c0_144 = arith.constant 0 : index
    %555 = vector.load %arg11[%554, %c0_144] : memref<64x96xf32, #tpu.memory_space<vmem>>, vector<8x96xf32>
    %556 = arith.truncf %511 : vector<8x32xf32> to vector<8x32xbf16>
    %cst_145 = arith.constant dense<0.000000e+00> : vector<8x96xf32>
    %557 = tpu.matmul %556, %13, %cst_145 {dimension_numbers = #tpu.dot_dimension_numbers<[1], [0], [0], [1], [0, 0, 1, 1], [], []>} : vector<8x32xbf16>, vector<32x96xbf16>, vector<8x96xf32> -> vector<8x96xf32>
    %558 = arith.truncf %538 : vector<8x32xf32> to vector<8x32xbf16>
    %cst_146 = arith.constant dense<0.000000e+00> : vector<8x96xf32>
    %559 = tpu.matmul %558, %14, %cst_146 {dimension_numbers = #tpu.dot_dimension_numbers<[1], [0], [0], [1], [0, 0, 1, 1], [], []>} : vector<8x32xbf16>, vector<32x96xbf16>, vector<8x96xf32> -> vector<8x96xf32>
    %560 = vector.extract_strided_slice %553 {offsets = [0, 0], sizes = [8, 32], strides = [1, 1]} : vector<8x96xf32> to vector<8x32xf32>
    %561 = vector.extract_strided_slice %557 {offsets = [0, 0], sizes = [8, 32], strides = [1, 1]} : vector<8x96xf32> to vector<8x32xf32>
    %562 = arith.addf %560, %561 : vector<8x32xf32>
    %563 = arith.negf %562 : vector<8x32xf32>
    %564 = math.exp %563 : vector<8x32xf32>
    %cst_147 = arith.constant 1.000000e+00 : f32
    %565 = vector.broadcast %cst_147 : f32 to vector<8x32xf32>
    %566 = arith.addf %565, %564 : vector<8x32xf32>
    %567 = arith.divf %565, %566 : vector<8x32xf32>
    %568 = vector.extract_strided_slice %553 {offsets = [0, 32], sizes = [8, 32], strides = [1, 1]} : vector<8x96xf32> to vector<8x32xf32>
    %569 = vector.extract_strided_slice %557 {offsets = [0, 32], sizes = [8, 32], strides = [1, 1]} : vector<8x96xf32> to vector<8x32xf32>
    %570 = arith.addf %568, %569 : vector<8x32xf32>
    %571 = arith.negf %570 : vector<8x32xf32>
    %572 = math.exp %571 : vector<8x32xf32>
    %cst_148 = arith.constant 1.000000e+00 : f32
    %573 = vector.broadcast %cst_148 : f32 to vector<8x32xf32>
    %574 = arith.addf %573, %572 : vector<8x32xf32>
    %575 = arith.divf %573, %574 : vector<8x32xf32>
    %576 = vector.extract_strided_slice %553 {offsets = [0, 64], sizes = [8, 32], strides = [1, 1]} : vector<8x96xf32> to vector<8x32xf32>
    %577 = vector.extract_strided_slice %557 {offsets = [0, 64], sizes = [8, 32], strides = [1, 1]} : vector<8x96xf32> to vector<8x32xf32>
    %578 = arith.addf %577, %17 : vector<8x32xf32>
    %579 = arith.mulf %567, %578 : vector<8x32xf32>
    %580 = arith.addf %576, %579 : vector<8x32xf32>
    %581 = math.tanh %580 : vector<8x32xf32>
    %cst_149 = arith.constant 1.000000e+00 : f32
    %582 = vector.broadcast %cst_149 : f32 to vector<8x32xf32>
    %583 = arith.subf %582, %575 : vector<8x32xf32>
    %584 = arith.mulf %583, %581 : vector<8x32xf32>
    %585 = arith.mulf %575, %511 : vector<8x32xf32>
    %586 = arith.addf %584, %585 : vector<8x32xf32>
    %587 = vector.extract_strided_slice %555 {offsets = [0, 0], sizes = [8, 32], strides = [1, 1]} : vector<8x96xf32> to vector<8x32xf32>
    %588 = vector.extract_strided_slice %559 {offsets = [0, 0], sizes = [8, 32], strides = [1, 1]} : vector<8x96xf32> to vector<8x32xf32>
    %589 = arith.addf %587, %588 : vector<8x32xf32>
    %590 = arith.negf %589 : vector<8x32xf32>
    %591 = math.exp %590 : vector<8x32xf32>
    %cst_150 = arith.constant 1.000000e+00 : f32
    %592 = vector.broadcast %cst_150 : f32 to vector<8x32xf32>
    %593 = arith.addf %592, %591 : vector<8x32xf32>
    %594 = arith.divf %592, %593 : vector<8x32xf32>
    %595 = vector.extract_strided_slice %555 {offsets = [0, 32], sizes = [8, 32], strides = [1, 1]} : vector<8x96xf32> to vector<8x32xf32>
    %596 = vector.extract_strided_slice %559 {offsets = [0, 32], sizes = [8, 32], strides = [1, 1]} : vector<8x96xf32> to vector<8x32xf32>
    %597 = arith.addf %595, %596 : vector<8x32xf32>
    %598 = arith.negf %597 : vector<8x32xf32>
    %599 = math.exp %598 : vector<8x32xf32>
    %cst_151 = arith.constant 1.000000e+00 : f32
    %600 = vector.broadcast %cst_151 : f32 to vector<8x32xf32>
    %601 = arith.addf %600, %599 : vector<8x32xf32>
    %602 = arith.divf %600, %601 : vector<8x32xf32>
    %603 = vector.extract_strided_slice %555 {offsets = [0, 64], sizes = [8, 32], strides = [1, 1]} : vector<8x96xf32> to vector<8x32xf32>
    %604 = vector.extract_strided_slice %559 {offsets = [0, 64], sizes = [8, 32], strides = [1, 1]} : vector<8x96xf32> to vector<8x32xf32>
    %605 = arith.addf %604, %20 : vector<8x32xf32>
    %606 = arith.mulf %594, %605 : vector<8x32xf32>
    %607 = arith.addf %603, %606 : vector<8x32xf32>
    %608 = math.tanh %607 : vector<8x32xf32>
    %cst_152 = arith.constant 1.000000e+00 : f32
    %609 = vector.broadcast %cst_152 : f32 to vector<8x32xf32>
    %610 = arith.subf %609, %602 : vector<8x32xf32>
    %611 = arith.mulf %610, %608 : vector<8x32xf32>
    %612 = arith.mulf %602, %538 : vector<8x32xf32>
    %613 = arith.addf %611, %612 : vector<8x32xf32>
    %614 = arith.index_cast %c7_i32_139 : i32 to index
    %c0_153 = arith.constant 0 : index
    %c0_154 = arith.constant 0 : index
    %615 = vector.load %arg9[%614, %c0_153, %c0_154] : memref<8x8x64xf32, #tpu.memory_space<vmem>>, vector<1x8x32xf32>
    %616 = vector.shape_cast %615 : vector<1x8x32xf32> to vector<8x32xf32>
    %617 = vector.shape_cast %586 : vector<8x32xf32> to vector<1x8x32xf32>
    tpu.vector_store %arg9[%614, %c0_153, %c0_154], %617 {strides = array<i32>} : memref<8x8x64xf32, #tpu.memory_space<vmem>>, vector<1x8x32xf32>,
    %618 = arith.index_cast %547 : i32 to index
    %c0_155 = arith.constant 0 : index
    %c32_156 = arith.constant 32 : index
    %619 = vector.load %arg9[%618, %c0_155, %c32_156] : memref<8x8x64xf32, #tpu.memory_space<vmem>>, vector<1x8x32xf32>
    %620 = vector.shape_cast %619 : vector<1x8x32xf32> to vector<8x32xf32>
    %621 = vector.shape_cast %613 : vector<8x32xf32> to vector<1x8x32xf32>
    tpu.vector_store %arg9[%618, %c0_155, %c32_156], %621 {strides = array<i32>} : memref<8x8x64xf32, #tpu.memory_space<vmem>>, vector<1x8x32xf32>,
    %c8_i32_157 = arith.constant 8 : i32
    return
  }
}

</mosaic_0001>

<llo_original>
// kernel: gru_context.1
$region0: #{gru_context.1}
  #allocation0 [shape = 'u32[]', space=smem, size = 0x4, offset = 0x4, fixed_abs, tag = 'smem constant byte address 0x4 - core index']
  #allocation1 [shape = 'u32[72,128]{1,0:T(1,128)}', space=vmem, size = 0x9000, scoped, tag = 'internal scratch']
  #allocation2 [shape = 'f32[64,96]{1,0:T(8,128)}', space=vmem, size = 0x8000, scoped, tag = 'scratch operand']
  #allocation3 [shape = 'f32[64,96]{1,0:T(8,128)}', space=vmem, size = 0x8000, scoped, tag = 'scratch operand']
  %s0 = inlined_call_operand.vmem [shape: bf16[64,16], index: 0, kind: input, shape index: {}]
  %s1 = inlined_call_operand.vmem [shape: bf16[16,96], index: 1, kind: input, shape index: {}]
  %s2 = inlined_call_operand.vmem [shape: bf16[16,96], index: 2, kind: input, shape index: {}]
  %s3 = inlined_call_operand.vmem [shape: bf16[32,96], index: 3, kind: input, shape index: {}]
  %s4 = inlined_call_operand.vmem [shape: bf16[32,96], index: 4, kind: input, shape index: {}]
  %s5 = inlined_call_operand.vmem [shape: f32[1,96], index: 5, kind: input, shape index: {}]
  %s6 = inlined_call_operand.vmem [shape: f32[1,96], index: 6, kind: input, shape index: {}]
  %s7 = inlined_call_operand.vmem [shape: f32[1,32], index: 7, kind: input, shape index: {}]
  %s8 = inlined_call_operand.vmem [shape: f32[1,32], index: 8, kind: input, shape index: {}]
  %s9 = inlined_call_operand.vmem [shape: f32[8,8,64], index: 9, kind: output, shape index: {}]
  %s10 = sld [smem:[#allocation0]]
  $region46: #{gru_context.1} parent=0
    _
  %s12 = ssub.s32 1, %s10
  %s13 = scalar_select 0, %s12, %s10
  // Predicated region
  $region2: #{gru_context.1} parent=0 // pred_check
    _
  $region3: #{gru_context.1} parent=0 // pred_check_branch
    %15 = sbr.rel (0) target = $region5
  $region4: #{gru_context.1} parent=0 // pred_region
    _
  $region5: #{gru_context.1} parent=0 // pred_fallthru
    _
  // Predicated region
  $region6: #{gru_context.1} parent=0 // pred_check
    _
  $region7: #{gru_context.1} parent=0 // pred_check_branch
    %17 = sbr.rel (0) target = $region9
  $region8: #{gru_context.1} parent=0 // pred_region
    _
  $region9: #{gru_context.1} parent=0 // pred_fallthru
    _
  // Predicated region
  $region10: #{gru_context.1} parent=0 // pred_check
    _
  $region11: #{gru_context.1} parent=0 // pred_check_branch
    %19 = sbr.rel (0) target = $region13
  $region12: #{gru_context.1} parent=0 // pred_region
    _
  $region13: #{gru_context.1} parent=0 // pred_fallthru
    _
  // Predicated region
  $region14: #{gru_context.1} parent=0 // pred_check
    _
  $region15: #{gru_context.1} parent=0 // pred_check_branch
    %21 = sbr.rel (0) target = $region17
  $region16: #{gru_context.1} parent=0 // pred_region
    _
  $region17: #{gru_context.1} parent=0 // pred_fallthru
    _
  // Predicated region
  $region18: #{gru_context.1} parent=0 // pred_check
    _
  $region19: #{gru_context.1} parent=0 // pred_check_branch
    %23 = sbr.rel (0) target = $region21
  $region20: #{gru_context.1} parent=0 // pred_region
    _
  $region21: #{gru_context.1} parent=0 // pred_fallthru
    _
  // Predicated region
  $region22: #{gru_context.1} parent=0 // pred_check
    _
  $region23: #{gru_context.1} parent=0 // pred_check_branch
    %25 = sbr.rel (0) target = $region25
  $region24: #{gru_context.1} parent=0 // pred_region
    _
  $region25: #{gru_context.1} parent=0 // pred_fallthru
    _
  // Predicated region
  $region26: #{gru_context.1} parent=0 // pred_check
    _
  $region27: #{gru_context.1} parent=0 // pred_check_branch
    %27 = sbr.rel (0) target = $region29
  $region28: #{gru_context.1} parent=0 // pred_region
    _
  $region29: #{gru_context.1} parent=0 // pred_fallthru
    _
  // Predicated region
  $region30: #{gru_context.1} parent=0 // pred_check
    _
  $region31: #{gru_context.1} parent=0 // pred_check_branch
    %29 = sbr.rel (0) target = $region33
  $region32: #{gru_context.1} parent=0 // pred_region
    _
  $region33: #{gru_context.1} parent=0 // pred_fallthru
    _
  // Predicated region
  $region34: #{gru_context.1} parent=0 // pred_check
    _
  $region35: #{gru_context.1} parent=0 // pred_check_branch
    %31 = sbr.rel (0) target = $region37
  $region36: #{gru_context.1} parent=0 // pred_region
    _
  $region37: #{gru_context.1} parent=0 // pred_fallthru
    _
  %v33 = vld [vmem:[%s0] sm:$0xf]
  %v34 = vld [vmem:[%s0 + $0x4] sm:$0xf]
  %v35 = vld [vmem:[%s0 + $0x8] sm:$0xf]
  %v36 = vld [vmem:[%s0 + $0xc] sm:$0xf]
  %v37 = vld [vmem:[%s0 + $0x10] sm:$0xf]
  %v38 = vld [vmem:[%s0 + $0x14] sm:$0xf]
  %v39 = vld [vmem:[%s0 + $0x18] sm:$0xf]
  %v40 = vld [vmem:[%s0 + $0x1c] sm:$0xf]
  %v41 = vld [vmem:[%s1] sm:$0xf]
  %v42 = vld [vmem:[%s1 + $0x4] sm:$0xf]
  %v43 = vld [vmem:[%s5] sm:$0x1]
  %v45 = vperm.slane %v43, 0
  %v55 = vunpack.c.l.b16 %v33
  %v56 = vunpack.c.l.b16 %v34
  %v57 = vunpack.c.l.b16 %v35
  %v58 = vunpack.c.l.b16 %v36
  %v59 = vunpack.c.l.b16 %v37
  %v60 = vunpack.c.l.b16 %v38
  %v61 = vunpack.c.l.b16 %v39
  %v62 = vunpack.c.l.b16 %v40
  %v63 = vpack.c.b16 %v56, %v55
  %v64 = vpack.c.b16 %v58, %v57
  %v65 = vpack.c.b16 %v60, %v59
  %v66 = vpack.c.b16 %v62, %v61
  %v69 = vunpack.c.l.b16 %v41
  %v70 = vunpack.c.l.b16 %v42
  %v71 = vpack.c.b16 %v70, %v69
  %vm73 = vcmask 130048
  %v75 = vsel %vm73, %v63, 0
  %v78 = vsel %vm73, %v64, 0
  %v81 = vsel %vm73, %v65, 0
  %v84 = vsel %vm73, %v66, 0
  %86 = vmatpush.bf16.msra.mxu0 0
  %87 = vmatpush.bf16.msra.mxu0 0
  %88 = vmatpush.bf16.msra.mxu0 0
  %89 = vmatpush.bf16.msra.mxu0 0
  %90 = vmatpush.bf16.msra.mxu0 0
  %91 = vmatpush.bf16.msra.mxu0 0
  %92 = vmatpush.bf16.msra.mxu0 0
  %93 = vmatpush.bf16.msra.mxu0 %v71
  %94 = vmatmul.bf16.gmra.mxu0 %v75
  %v95 = vpop.f32.mrf.mxu0
  %v96 = vadd.f32 %v45, %v95
  %v97 = vpop.f32.mrf.mxu0
  %v98 = vadd.f32 %v45, %v97
  %99 = vmatmul.bf16.gmra.mxu0 %v78
  %v100 = vpop.f32.mrf.mxu0
  %v101 = vadd.f32 %v45, %v100
  %v102 = vpop.f32.mrf.mxu0
  %v103 = vadd.f32 %v45, %v102
  %104 = vmatmul.bf16.gmra.mxu0 %v81
  %v105 = vpop.f32.mrf.mxu0
  %v106 = vadd.f32 %v45, %v105
  %v107 = vpop.f32.mrf.mxu0
  %v108 = vadd.f32 %v45, %v107
  %109 = vmatmul.bf16.gmra.mxu0 %v84
  %v110 = vpop.f32.mrf.mxu0
  %v111 = vadd.f32 %v45, %v110
  %v112 = vpop.f32.mrf.mxu0
  %v113 = vadd.f32 %v45, %v112
  %114 = vdwg.mxu0
  %vm115 = vcmask 785408
  %116 = vst.msk [vmem:[#allocation2] sm:$0xff] %vm115, %v96
  %117 = vst.msk [vmem:[#allocation2 + $0x8] sm:$0xff] %vm115, %v98
  %118 = vst.msk [vmem:[#allocation2 + $0x10] sm:$0xff] %vm115, %v101
  %119 = vst.msk [vmem:[#allocation2 + $0x18] sm:$0xff] %vm115, %v103
  %120 = vst.msk [vmem:[#allocation2 + $0x20] sm:$0xff] %vm115, %v106
  %121 = vst.msk [vmem:[#allocation2 + $0x28] sm:$0xff] %vm115, %v108
  %122 = vst.msk [vmem:[#allocation2 + $0x30] sm:$0xff] %vm115, %v111
  %123 = vst.msk [vmem:[#allocation2 + $0x38] sm:$0xff] %vm115, %v113
  %v124 = vld [vmem:[%s2] sm:$0xf]
  %v125 = vld [vmem:[%s2 + $0x4] sm:$0xf]
  %v126 = vld [vmem:[%s6] sm:$0x1]
  %v128 = vperm.slane %v126, 0
  %v132 = vunpack.c.l.b16 %v124
  %v133 = vunpack.c.l.b16 %v125
  %v134 = vpack.c.b16 %v133, %v132
  %136 = vmatpush.bf16.msra.mxu0 0
  %137 = vmatpush.bf16.msra.mxu0 0
  %138 = vmatpush.bf16.msra.mxu0 0
  %139 = vmatpush.bf16.msra.mxu0 0
  %140 = vmatpush.bf16.msra.mxu0 0
  %141 = vmatpush.bf16.msra.mxu0 0
  %142 = vmatpush.bf16.msra.mxu0 0
  %143 = vmatpush.bf16.msra.mxu0 %v134
  %144 = vmatmul.bf16.gmra.mxu0 %v75
  %v145 = vpop.f32.mrf.mxu0
  %v146 = vadd.f32 %v128, %v145
  %v147 = vpop.f32.mrf.mxu0
  %v148 = vadd.f32 %v128, %v147
  %149 = vmatmul.bf16.gmra.mxu0 %v78
  %v150 = vpop.f32.mrf.mxu0
  %v151 = vadd.f32 %v128, %v150
  %v152 = vpop.f32.mrf.mxu0
  %v153 = vadd.f32 %v128, %v152
  %154 = vmatmul.bf16.gmra.mxu0 %v81
  %v155 = vpop.f32.mrf.mxu0
  %v156 = vadd.f32 %v128, %v155
  %v157 = vpop.f32.mrf.mxu0
  %v158 = vadd.f32 %v128, %v157
  %159 = vmatmul.bf16.gmra.mxu0 %v84
  %v160 = vpop.f32.mrf.mxu0
  %v161 = vadd.f32 %v128, %v160
  %v162 = vpop.f32.mrf.mxu0
  %v163 = vadd.f32 %v128, %v162
  %164 = vdwg.mxu0
  %165 = vst.msk [vmem:[#allocation3] sm:$0xff] %vm115, %v146
  %166 = vst.msk [vmem:[#allocation3 + $0x8] sm:$0xff] %vm115, %v148
  %167 = vst.msk [vmem:[#allocation3 + $0x10] sm:$0xff] %vm115, %v151
  %168 = vst.msk [vmem:[#allocation3 + $0x18] sm:$0xff] %vm115, %v153
  %169 = vst.msk [vmem:[#allocation3 + $0x20] sm:$0xff] %vm115, %v156
  %170 = vst.msk [vmem:[#allocation3 + $0x28] sm:$0xff] %vm115, %v158
  %171 = vst.msk [vmem:[#allocation3 + $0x30] sm:$0xff] %vm115, %v161
  %172 = vst.msk [vmem:[#allocation3 + $0x38] sm:$0xff] %vm115, %v163
  %v173 = vld [vmem:[%s3] sm:$0xf]
  %v174 = vld [vmem:[%s3 + $0x4] sm:$0xf]
  %v175 = vld [vmem:[%s3 + $0x8] sm:$0xf]
  %v176 = vld [vmem:[%s3 + $0xc] sm:$0xf]
  %v177 = vld [vmem:[%s4] sm:$0xf]
  %v178 = vld [vmem:[%s4 + $0x4] sm:$0xf]
  %v179 = vld [vmem:[%s4 + $0x8] sm:$0xf]
  %v180 = vld [vmem:[%s4 + $0xc] sm:$0xf]
  %v181 = vld [vmem:[%s7] sm:$0x1]
  %v183 = vperm.slane %v181, 0
  %v184 = vld [vmem:[%s8] sm:$0x1]
  %v186 = vperm.slane %v184, 0
  %v187 = vld [vmem:[#allocation2] sm:$0xff]
  %s188 = scalar_lea.vmem [#allocation3], 56
  %v189 = vld [vmem:[%s188] sm:$0xff]
  %v194 = vunpack.c.l.b16 %v173
  %v195 = vunpack.c.l.b16 %v174
  %v196 = vunpack.c.l.b16 %v175
  %v197 = vunpack.c.l.b16 %v176
  %v198 = vpack.c.b16 %v195, %v194
  %v199 = vpack.c.b16 %v197, %v196
  %vm202 = vcmask 261120
  %v204 = vsel %vm202, 0, 0
  %206 = vmatpush.bf16.msra.mxu0 0
  %207 = vmatpush.bf16.msra.mxu0 0
  %208 = vmatpush.bf16.msra.mxu0 0
  %209 = vmatpush.bf16.msra.mxu0 0
  %210 = vmatpush.bf16.msra.mxu0 0
  %211 = vmatpush.bf16.msra.mxu0 0
  %212 = vmatpush.bf16.msra.mxu0 %v199
  %213 = vmatpush.bf16.msra.mxu0 %v198
  %214 = vmatmul.bf16.gmra.mxu0 %v204
  %v215 = vpop.f32.mrf.mxu0
  %v216 = vadd.f32 0.0, %v215
  %v217 = vpop.f32.mrf.mxu0
  %218 = vdwg.mxu0
  %v223 = vunpack.c.l.b16 %v177
  %v224 = vunpack.c.l.b16 %v178
  %v225 = vunpack.c.l.b16 %v179
  %v226 = vunpack.c.l.b16 %v180
  %v227 = vpack.c.b16 %v224, %v223
  %v228 = vpack.c.b16 %v226, %v225
  %231 = vmatpush.bf16.msra.mxu0 0
  %232 = vmatpush.bf16.msra.mxu0 0
  %233 = vmatpush.bf16.msra.mxu0 0
  %234 = vmatpush.bf16.msra.mxu0 0
  %235 = vmatpush.bf16.msra.mxu0 0
  %236 = vmatpush.bf16.msra.mxu0 0
  %237 = vmatpush.bf16.msra.mxu0 %v228
  %238 = vmatpush.bf16.msra.mxu0 %v227
  %239 = vmatmul.bf16.gmra.mxu0 %v204
  %v240 = vpop.f32.mrf.mxu0
  %v241 = vadd.f32 0.0, %v240
  %v242 = vpop.f32.mrf.mxu0
  %243 = vdwg.mxu0
  %v244 = vadd.f32 %v187, %v216
  %v245 = vxor.u32 %v244, 2147483648
  %v246 = vmul.f32 %v245, 1.442695
  %v247 = vpow.pop %v246
  %v248 = vadd.f32 %v247, 1.0
  %v249 = vrcp.pop %v248
  %v250 = vmul.f32 %v248, %v249
  %v251 = vsub.f32 1.0, %v250
  %v252 = vmul.f32 %v249, %v251
  %v253 = vadd.f32 %v249, %v252
  %vm254 = vweird.f32 %v248
  %vm255 = vweird.f32 %v249
  %vm256 = vmor %vm254, %vm255
  %v257 = vsel %vm256, %v249, %v253
  %v258 = vand.u32 2147483647, %v248
  %vm259 = vcmp.eq.f32.partialorder %v258, 8.507059e+37
  %v260 = vand.u32 %v248, 2147483648
  %v261 = vor.u32 1.1754944e-38, %v260
  %v262 = vsel %vm259, %v261, %v257
  %v263 = vmul.f32 1.0, %v262
  %264 = vrot.lane.b32.xlu0 %v183, 64
  %v265 = vpop.permute.xlu0 %264
  %v267 = vadd.f32 %v216, %v265
  %269 = vrot.lane.b32.xlu0 %v267, 64
  %v270 = vpop.permute.xlu0 %269
  %v272 = vmul.f32 %v263, %v270
  %274 = vrot.lane.b32.xlu0 %v272, 64
  %v275 = vpop.permute.xlu0 %274
  %v277 = vadd.f32 %v187, %v275
  %v278 = vtanh.pop %v277
  %v279 = vsub.f32 1.0, %v263
  %281 = vrot.lane.b32.xlu0 %v278, 96
  %v282 = vpop.permute.xlu0 %281
  %v284 = vmul.f32 %v279, %v282
  %v285 = vmul.f32 %v263, 0.0
  %v286 = vadd.f32 %v284, %v285
  %v287 = vadd.f32 %v189, %v241
  %v288 = vxor.u32 %v287, 2147483648
  %v289 = vmul.f32 %v288, 1.442695
  %v290 = vpow.pop %v289
  %v291 = vadd.f32 %v290, 1.0
  %v292 = vrcp.pop %v291
  %v293 = vmul.f32 %v291, %v292
  %v294 = vsub.f32 1.0, %v293
  %v295 = vmul.f32 %v292, %v294
  %v296 = vadd.f32 %v292, %v295
  %vm297 = vweird.f32 %v291
  %vm298 = vweird.f32 %v292
  %vm299 = vmor %vm297, %vm298
  %v300 = vsel %vm299, %v292, %v296
  %v301 = vand.u32 2147483647, %v291
  %vm302 = vcmp.eq.f32.partialorder %v301, 8.507059e+37
  %v303 = vand.u32 %v291, 2147483648
  %v304 = vor.u32 1.1754944e-38, %v303
  %v305 = vsel %vm302, %v304, %v300
  %v306 = vmul.f32 1.0, %v305
  %307 = vrot.lane.b32.xlu0 %v186, 64
  %v308 = vpop.permute.xlu0 %307
  %v310 = vadd.f32 %v241, %v308
  %312 = vrot.lane.b32.xlu0 %v310, 64
  %v313 = vpop.permute.xlu0 %312
  %v315 = vmul.f32 %v306, %v313
  %317 = vrot.lane.b32.xlu0 %v315, 64
  %v318 = vpop.permute.xlu0 %317
  %v320 = vadd.f32 %v189, %v318
  %v321 = vtanh.pop %v320
  %v322 = vsub.f32 1.0, %v306
  %324 = vrot.lane.b32.xlu0 %v321, 96
  %v325 = vpop.permute.xlu0 %324
  %v327 = vmul.f32 %v322, %v325
  %v328 = vmul.f32 %v306, 0.0
  %v329 = vadd.f32 %v327, %v328
  %331 = vrot.lane.b32.xlu0 %v286, 96
  %v332 = vpop.permute.xlu0 %331
  %334 = vst.msk [vmem:[%s9] sm:$0xff] %vm202, %v332
  %s335 = scalar_lea.vmem %s9, 56
  %vm336 = vcmask 523520
  %337 = vst.msk [vmem:[%s335] sm:$0xff] %vm336, %v329
  %s338 = scalar_lea.vmem [#allocation2], 8
  %v339 = vld [vmem:[%s338] sm:$0xff]
  %s340 = scalar_lea.vmem [#allocation3], 48
  %v341 = vld [vmem:[%s340] sm:$0xff]
  %v342 = vpack.c.bf16 %v286, %v286
  %344 = vrot.lane.b32.xlu0 %v342, 96
  %v345 = vpop.permute.xlu0 %344
  %v347 = vsel %vm202, %v345, 0
  %349 = vmatpush.bf16.msra.mxu0 0
  %350 = vmatpush.bf16.msra.mxu0 0
  %351 = vmatpush.bf16.msra.mxu0 0
  %352 = vmatpush.bf16.msra.mxu0 0
  %353 = vmatpush.bf16.msra.mxu0 0
  %354 = vmatpush.bf16.msra.mxu0 0
  %355 = vmatpush.bf16.msra.mxu0 %v199
  %356 = vmatpush.bf16.msra.mxu0 %v198
  %357 = vmatmul.bf16.gmra.mxu0 %v347
  %v358 = vpop.f32.mrf.mxu0
  %v359 = vadd.f32 0.0, %v358
  %v360 = vpop.f32.mrf.mxu0
  %361 = vdwg.mxu0
  %v362 = vpack.c.bf16 %v329, %v329
  %364 = vrot.lane.b32.xlu0 %v362, 96
  %v365 = vpop.permute.xlu0 %364
  %v367 = vsel %vm202, %v365, 0
  %369 = vmatpush.bf16.msra.mxu0 0
  %370 = vmatpush.bf16.msra.mxu0 0
  %371 = vmatpush.bf16.msra.mxu0 0
  %372 = vmatpush.bf16.msra.mxu0 0
  %373 = vmatpush.bf16.msra.mxu0 0
  %374 = vmatpush.bf16.msra.mxu0 0
  %375 = vmatpush.bf16.msra.mxu0 %v228
  %376 = vmatpush.bf16.msra.mxu0 %v227
  %377 = vmatmul.bf16.gmra.mxu0 %v367
  %v378 = vpop.f32.mrf.mxu0
  %v379 = vadd.f32 0.0, %v378
  %v380 = vpop.f32.mrf.mxu0
  %381 = vdwg.mxu0
  %v382 = vadd.f32 %v339, %v359
  %v383 = vxor.u32 %v382, 2147483648
  %v384 = vmul.f32 %v383, 1.442695
  %v385 = vpow.pop %v384
  %v386 = vadd.f32 %v385, 1.0
  %v387 = vrcp.pop %v386
  %v388 = vmul.f32 %v386, %v387
  %v389 = vsub.f32 1.0, %v388
  %v390 = vmul.f32 %v387, %v389
  %v391 = vadd.f32 %v387, %v390
  %vm392 = vweird.f32 %v386
  %vm393 = vweird.f32 %v387
  %vm394 = vmor %vm392, %vm393
  %v395 = vsel %vm394, %v387, %v391
  %v396 = vand.u32 2147483647, %v386
  %vm397 = vcmp.eq.f32.partialorder %v396, 8.507059e+37
  %v398 = vand.u32 %v386, 2147483648
  %v399 = vor.u32 1.1754944e-38, %v398
  %v400 = vsel %vm397, %v399, %v395
  %v401 = vmul.f32 1.0, %v400
  %v402 = vadd.f32 %v359, %v265
  %404 = vrot.lane.b32.xlu0 %v402, 64
  %v405 = vpop.permute.xlu0 %404
  %v407 = vmul.f32 %v401, %v405
  %409 = vrot.lane.b32.xlu0 %v407, 64
  %v410 = vpop.permute.xlu0 %409
  %v412 = vadd.f32 %v339, %v410
  %v413 = vtanh.pop %v412
  %v414 = vsub.f32 1.0, %v401
  %416 = vrot.lane.b32.xlu0 %v413, 96
  %v417 = vpop.permute.xlu0 %416
  %v419 = vmul.f32 %v414, %v417
  %v420 = vmul.f32 %v401, %v286
  %v421 = vadd.f32 %v419, %v420
  %v422 = vadd.f32 %v341, %v379
  %v423 = vxor.u32 %v422, 2147483648
  %v424 = vmul.f32 %v423, 1.442695
  %v425 = vpow.pop %v424
  %v426 = vadd.f32 %v425, 1.0
  %v427 = vrcp.pop %v426
  %v428 = vmul.f32 %v426, %v427
  %v429 = vsub.f32 1.0, %v428
  %v430 = vmul.f32 %v427, %v429
  %v431 = vadd.f32 %v427, %v430
  %vm432 = vweird.f32 %v426
  %vm433 = vweird.f32 %v427
  %vm434 = vmor %vm432, %vm433
  %v435 = vsel %vm434, %v427, %v431
  %v436 = vand.u32 2147483647, %v426
  %vm437 = vcmp.eq.f32.partialorder %v436, 8.507059e+37
  %v438 = vand.u32 %v426, 2147483648
  %v439 = vor.u32 1.1754944e-38, %v438
  %v440 = vsel %vm437, %v439, %v435
  %v441 = vmul.f32 1.0, %v440
  %v442 = vadd.f32 %v379, %v308
  %444 = vrot.lane.b32.xlu0 %v442, 64
  %v445 = vpop.permute.xlu0 %444
  %v447 = vmul.f32 %v441, %v445
  %449 = vrot.lane.b32.xlu0 %v447, 64
  %v450 = vpop.permute.xlu0 %449
  %v452 = vadd.f32 %v341, %v450
  %v453 = vtanh.pop %v452
  %v454 = vsub.f32 1.0, %v441
  %456 = vrot.lane.b32.xlu0 %v453, 96
  %v457 = vpop.permute.xlu0 %456
  %v459 = vmul.f32 %v454, %v457
  %v460 = vmul.f32 %v441, %v329
  %v461 = vadd.f32 %v459, %v460
  %463 = vrot.lane.b32.xlu0 %v421, 96
  %v464 = vpop.permute.xlu0 %463
  %s466 = scalar_lea.vmem %s9, 8
  %467 = vst.msk [vmem:[%s466] sm:$0xff] %vm202, %v464
  %s468 = scalar_lea.vmem %s9, 48
  %469 = vst.msk [vmem:[%s468] sm:$0xff] %vm336, %v461
  %s470 = scalar_lea.vmem [#allocation2], 16
  %v471 = vld [vmem:[%s470] sm:$0xff]
  %s472 = scalar_lea.vmem [#allocation3], 40
  %v473 = vld [vmem:[%s472] sm:$0xff]
  %v474 = vpack.c.bf16 %v421, %v421
  %476 = vrot.lane.b32.xlu0 %v474, 96
  %v477 = vpop.permute.xlu0 %476
  %v479 = vsel %vm202, %v477, 0
  %481 = vmatpush.bf16.msra.mxu0 0
  %482 = vmatpush.bf16.msra.mxu0 0
  %483 = vmatpush.bf16.msra.mxu0 0
  %484 = vmatpush.bf16.msra.mxu0 0
  %485 = vmatpush.bf16.msra.mxu0 0
  %486 = vmatpush.bf16.msra.mxu0 0
  %487 = vmatpush.bf16.msra.mxu0 %v199
  %488 = vmatpush.bf16.msra.mxu0 %v198
  %489 = vmatmul.bf16.gmra.mxu0 %v479
  %v490 = vpop.f32.mrf.mxu0
  %v491 = vadd.f32 0.0, %v490
  %v492 = vpop.f32.mrf.mxu0
  %493 = vdwg.mxu0
  %v494 = vpack.c.bf16 %v461, %v461
  %496 = vrot.lane.b32.xlu0 %v494, 96
  %v497 = vpop.permute.xlu0 %496
  %v499 = vsel %vm202, %v497, 0
  %501 = vmatpush.bf16.msra.mxu0 0
  %502 = vmatpush.bf16.msra.mxu0 0
  %503 = vmatpush.bf16.msra.mxu0 0
  %504 = vmatpush.bf16.msra.mxu0 0
  %505 = vmatpush.bf16.msra.mxu0 0
  %506 = vmatpush.bf16.msra.mxu0 0
  %507 = vmatpush.bf16.msra.mxu0 %v228
  %508 = vmatpush.bf16.msra.mxu0 %v227
  %509 = vmatmul.bf16.gmra.mxu0 %v499
  %v510 = vpop.f32.mrf.mxu0
  %v511 = vadd.f32 0.0, %v510
  %v512 = vpop.f32.mrf.mxu0
  %513 = vdwg.mxu0
  %v514 = vadd.f32 %v471, %v491
  %v515 = vxor.u32 %v514, 2147483648
  %v516 = vmul.f32 %v515, 1.442695
  %v517 = vpow.pop %v516
  %v518 = vadd.f32 %v517, 1.0
  %v519 = vrcp.pop %v518
  %v520 = vmul.f32 %v518, %v519
  %v521 = vsub.f32 1.0, %v520
  %v522 = vmul.f32 %v519, %v521
  %v523 = vadd.f32 %v519, %v522
  %vm524 = vweird.f32 %v518
  %vm525 = vweird.f32 %v519
  %vm526 = vmor %vm524, %vm525
  %v527 = vsel %vm526, %v519, %v523
  %v528 = vand.u32 2147483647, %v518
  %vm529 = vcmp.eq.f32.partialorder %v528, 8.507059e+37
  %v530 = vand.u32 %v518, 2147483648
  %v531 = vor.u32 1.1754944e-38, %v530
  %v532 = vsel %vm529, %v531, %v527
  %v533 = vmul.f32 1.0, %v532
  %v534 = vadd.f32 %v491, %v265
  %536 = vrot.lane.b32.xlu0 %v534, 64
  %v537 = vpop.permute.xlu0 %536
  %v539 = vmul.f32 %v533, %v537
  %541 = vrot.lane.b32.xlu0 %v539, 64
  %v542 = vpop.permute.xlu0 %541
  %v544 = vadd.f32 %v471, %v542
  %v545 = vtanh.pop %v544
  %v546 = vsub.f32 1.0, %v533
  %548 = vrot.lane.b32.xlu0 %v545, 96
  %v549 = vpop.permute.xlu0 %548
  %v551 = vmul.f32 %v546, %v549
  %v552 = vmul.f32 %v533, %v421
  %v553 = vadd.f32 %v551, %v552
  %v554 = vadd.f32 %v473, %v511
  %v555 = vxor.u32 %v554, 2147483648
  %v556 = vmul.f32 %v555, 1.442695
  %v557 = vpow.pop %v556
  %v558 = vadd.f32 %v557, 1.0
  %v559 = vrcp.pop %v558
  %v560 = vmul.f32 %v558, %v559
  %v561 = vsub.f32 1.0, %v560
  %v562 = vmul.f32 %v559, %v561
  %v563 = vadd.f32 %v559, %v562
  %vm564 = vweird.f32 %v558
  %vm565 = vweird.f32 %v559
  %vm566 = vmor %vm564, %vm565
  %v567 = vsel %vm566, %v559, %v563
  %v568 = vand.u32 2147483647, %v558
  %vm569 = vcmp.eq.f32.partialorder %v568, 8.507059e+37
  %v570 = vand.u32 %v558, 2147483648
  %v571 = vor.u32 1.1754944e-38, %v570
  %v572 = vsel %vm569, %v571, %v567
  %v573 = vmul.f32 1.0, %v572
  %v574 = vadd.f32 %v511, %v308
  %576 = vrot.lane.b32.xlu0 %v574, 64
  %v577 = vpop.permute.xlu0 %576
  %v579 = vmul.f32 %v573, %v577
  %581 = vrot.lane.b32.xlu0 %v579, 64
  %v582 = vpop.permute.xlu0 %581
  %v584 = vadd.f32 %v473, %v582
  %v585 = vtanh.pop %v584
  %v586 = vsub.f32 1.0, %v573
  %588 = vrot.lane.b32.xlu0 %v585, 96
  %v589 = vpop.permute.xlu0 %588
  %v591 = vmul.f32 %v586, %v589
  %v592 = vmul.f32 %v573, %v461
  %v593 = vadd.f32 %v591, %v592
  %595 = vrot.lane.b32.xlu0 %v553, 96
  %v596 = vpop.permute.xlu0 %595
  %s598 = scalar_lea.vmem %s9, 16
  %599 = vst.msk [vmem:[%s598] sm:$0xff] %vm202, %v596
  %s600 = scalar_lea.vmem %s9, 40
  %601 = vst.msk [vmem:[%s600] sm:$0xff] %vm336, %v593
  %s602 = scalar_lea.vmem [#allocation2], 24
  %v603 = vld [vmem:[%s602] sm:$0xff]
  %s604 = scalar_lea.vmem [#allocation3], 32
  %v605 = vld [vmem:[%s604] sm:$0xff]
  %v606 = vpack.c.bf16 %v553, %v553
  %608 = vrot.lane.b32.xlu0 %v606, 96
  %v609 = vpop.permute.xlu0 %608
  %v611 = vsel %vm202, %v609, 0
  %613 = vmatpush.bf16.msra.mxu0 0
  %614 = vmatpush.bf16.msra.mxu0 0
  %615 = vmatpush.bf16.msra.mxu0 0
  %616 = vmatpush.bf16.msra.mxu0 0
  %617 = vmatpush.bf16.msra.mxu0 0
  %618 = vmatpush.bf16.msra.mxu0 0
  %619 = vmatpush.bf16.msra.mxu0 %v199
  %620 = vmatpush.bf16.msra.mxu0 %v198
  %621 = vmatmul.bf16.gmra.mxu0 %v611
  %v622 = vpop.f32.mrf.mxu0
  %v623 = vadd.f32 0.0, %v622
  %v624 = vpop.f32.mrf.mxu0
  %625 = vdwg.mxu0
  %v626 = vpack.c.bf16 %v593, %v593
  %628 = vrot.lane.b32.xlu0 %v626, 96
  %v629 = vpop.permute.xlu0 %628
  %v631 = vsel %vm202, %v629, 0
  %633 = vmatpush.bf16.msra.mxu0 0
  %634 = vmatpush.bf16.msra.mxu0 0
  %635 = vmatpush.bf16.msra.mxu0 0
  %636 = vmatpush.bf16.msra.mxu0 0
  %637 = vmatpush.bf16.msra.mxu0 0
  %638 = vmatpush.bf16.msra.mxu0 0
  %639 = vmatpush.bf16.msra.mxu0 %v228
  %640 = vmatpush.bf16.msra.mxu0 %v227
  %641 = vmatmul.bf16.gmra.mxu0 %v631
  %v642 = vpop.f32.mrf.mxu0
  %v643 = vadd.f32 0.0, %v642
  %v644 = vpop.f32.mrf.mxu0
  %645 = vdwg.mxu0
  %v646 = vadd.f32 %v603, %v623
  %v647 = vxor.u32 %v646, 2147483648
  %v648 = vmul.f32 %v647, 1.442695
  %v649 = vpow.pop %v648
  %v650 = vadd.f32 %v649, 1.0
  %v651 = vrcp.pop %v650
  %v652 = vmul.f32 %v650, %v651
  %v653 = vsub.f32 1.0, %v652
  %v654 = vmul.f32 %v651, %v653
  %v655 = vadd.f32 %v651, %v654
  %vm656 = vweird.f32 %v650
  %vm657 = vweird.f32 %v651
  %vm658 = vmor %vm656, %vm657
  %v659 = vsel %vm658, %v651, %v655
  %v660 = vand.u32 2147483647, %v650
  %vm661 = vcmp.eq.f32.partialorder %v660, 8.507059e+37
  %v662 = vand.u32 %v650, 2147483648
  %v663 = vor.u32 1.1754944e-38, %v662
  %v664 = vsel %vm661, %v663, %v659
  %v665 = vmul.f32 1.0, %v664
  %v666 = vadd.f32 %v623, %v265
  %668 = vrot.lane.b32.xlu0 %v666, 64
  %v669 = vpop.permute.xlu0 %668
  %v671 = vmul.f32 %v665, %v669
  %673 = vrot.lane.b32.xlu0 %v671, 64
  %v674 = vpop.permute.xlu0 %673
  %v676 = vadd.f32 %v603, %v674
  %v677 = vtanh.pop %v676
  %v678 = vsub.f32 1.0, %v665
  %680 = vrot.lane.b32.xlu0 %v677, 96
  %v681 = vpop.permute.xlu0 %680
  %v683 = vmul.f32 %v678, %v681
  %v684 = vmul.f32 %v665, %v553
  %v685 = vadd.f32 %v683, %v684
  %v686 = vadd.f32 %v605, %v643
  %v687 = vxor.u32 %v686, 2147483648
  %v688 = vmul.f32 %v687, 1.442695
  %v689 = vpow.pop %v688
  %v690 = vadd.f32 %v689, 1.0
  %v691 = vrcp.pop %v690
  %v692 = vmul.f32 %v690, %v691
  %v693 = vsub.f32 1.0, %v692
  %v694 = vmul.f32 %v691, %v693
  %v695 = vadd.f32 %v691, %v694
  %vm696 = vweird.f32 %v690
  %vm697 = vweird.f32 %v691
  %vm698 = vmor %vm696, %vm697
  %v699 = vsel %vm698, %v691, %v695
  %v700 = vand.u32 2147483647, %v690
  %vm701 = vcmp.eq.f32.partialorder %v700, 8.507059e+37
  %v702 = vand.u32 %v690, 2147483648
  %v703 = vor.u32 1.1754944e-38, %v702
  %v704 = vsel %vm701, %v703, %v699
  %v705 = vmul.f32 1.0, %v704
  %v706 = vadd.f32 %v643, %v308
  %708 = vrot.lane.b32.xlu0 %v706, 64
  %v709 = vpop.permute.xlu0 %708
  %v711 = vmul.f32 %v705, %v709
  %713 = vrot.lane.b32.xlu0 %v711, 64
  %v714 = vpop.permute.xlu0 %713
  %v716 = vadd.f32 %v605, %v714
  %v717 = vtanh.pop %v716
  %v718 = vsub.f32 1.0, %v705
  %720 = vrot.lane.b32.xlu0 %v717, 96
  %v721 = vpop.permute.xlu0 %720
  %v723 = vmul.f32 %v718, %v721
  %v724 = vmul.f32 %v705, %v593
  %v725 = vadd.f32 %v723, %v724
  %727 = vrot.lane.b32.xlu0 %v685, 96
  %v728 = vpop.permute.xlu0 %727
  %s730 = scalar_lea.vmem %s9, 24
  %731 = vst.msk [vmem:[%s730] sm:$0xff] %vm202, %v728
  %s732 = scalar_lea.vmem %s9, 32
  %733 = vst.msk [vmem:[%s732] sm:$0xff] %vm336, %v725
  %s734 = scalar_lea.vmem [#allocation2], 32
  %v735 = vld [vmem:[%s734] sm:$0xff]
  %s736 = scalar_lea.vmem [#allocation3], 24
  %v737 = vld [vmem:[%s736] sm:$0xff]
  %v738 = vpack.c.bf16 %v685, %v685
  %740 = vrot.lane.b32.xlu0 %v738, 96
  %v741 = vpop.permute.xlu0 %740
  %v743 = vsel %vm202, %v741, 0
  %745 = vmatpush.bf16.msra.mxu0 0
  %746 = vmatpush.bf16.msra.mxu0 0
  %747 = vmatpush.bf16.msra.mxu0 0
  %748 = vmatpush.bf16.msra.mxu0 0
  %749 = vmatpush.bf16.msra.mxu0 0
  %750 = vmatpush.bf16.msra.mxu0 0
  %751 = vmatpush.bf16.msra.mxu0 %v199
  %752 = vmatpush.bf16.msra.mxu0 %v198
  %753 = vmatmul.bf16.gmra.mxu0 %v743
  %v754 = vpop.f32.mrf.mxu0
  %v755 = vadd.f32 0.0, %v754
  %v756 = vpop.f32.mrf.mxu0
  %757 = vdwg.mxu0
  %v758 = vpack.c.bf16 %v725, %v725
  %760 = vrot.lane.b32.xlu0 %v758, 96
  %v761 = vpop.permute.xlu0 %760
  %v763 = vsel %vm202, %v761, 0
  %765 = vmatpush.bf16.msra.mxu0 0
  %766 = vmatpush.bf16.msra.mxu0 0
  %767 = vmatpush.bf16.msra.mxu0 0
  %768 = vmatpush.bf16.msra.mxu0 0
  %769 = vmatpush.bf16.msra.mxu0 0
  %770 = vmatpush.bf16.msra.mxu0 0
  %771 = vmatpush.bf16.msra.mxu0 %v228
  %772 = vmatpush.bf16.msra.mxu0 %v227
  %773 = vmatmul.bf16.gmra.mxu0 %v763
  %v774 = vpop.f32.mrf.mxu0
  %v775 = vadd.f32 0.0, %v774
  %v776 = vpop.f32.mrf.mxu0
  %777 = vdwg.mxu0
  %v778 = vadd.f32 %v735, %v755
  %v779 = vxor.u32 %v778, 2147483648
  %v780 = vmul.f32 %v779, 1.442695
  %v781 = vpow.pop %v780
  %v782 = vadd.f32 %v781, 1.0
  %v783 = vrcp.pop %v782
  %v784 = vmul.f32 %v782, %v783
  %v785 = vsub.f32 1.0, %v784
  %v786 = vmul.f32 %v783, %v785
  %v787 = vadd.f32 %v783, %v786
  %vm788 = vweird.f32 %v782
  %vm789 = vweird.f32 %v783
  %vm790 = vmor %vm788, %vm789
  %v791 = vsel %vm790, %v783, %v787
  %v792 = vand.u32 2147483647, %v782
  %vm793 = vcmp.eq.f32.partialorder %v792, 8.507059e+37
  %v794 = vand.u32 %v782, 2147483648
  %v795 = vor.u32 1.1754944e-38, %v794
  %v796 = vsel %vm793, %v795, %v791
  %v797 = vmul.f32 1.0, %v796
  %v798 = vadd.f32 %v755, %v265
  %800 = vrot.lane.b32.xlu0 %v798, 64
  %v801 = vpop.permute.xlu0 %800
  %v803 = vmul.f32 %v797, %v801
  %805 = vrot.lane.b32.xlu0 %v803, 64
  %v806 = vpop.permute.xlu0 %805
  %v808 = vadd.f32 %v735, %v806
  %v809 = vtanh.pop %v808
  %v810 = vsub.f32 1.0, %v797
  %812 = vrot.lane.b32.xlu0 %v809, 96
  %v813 = vpop.permute.xlu0 %812
  %v815 = vmul.f32 %v810, %v813
  %v816 = vmul.f32 %v797, %v685
  %v817 = vadd.f32 %v815, %v816
  %v818 = vadd.f32 %v737, %v775
  %v819 = vxor.u32 %v818, 2147483648
  %v820 = vmul.f32 %v819, 1.442695
  %v821 = vpow.pop %v820
  %v822 = vadd.f32 %v821, 1.0
  %v823 = vrcp.pop %v822
  %v824 = vmul.f32 %v822, %v823
  %v825 = vsub.f32 1.0, %v824
  %v826 = vmul.f32 %v823, %v825
  %v827 = vadd.f32 %v823, %v826
  %vm828 = vweird.f32 %v822
  %vm829 = vweird.f32 %v823
  %vm830 = vmor %vm828, %vm829
  %v831 = vsel %vm830, %v823, %v827
  %v832 = vand.u32 2147483647, %v822
  %vm833 = vcmp.eq.f32.partialorder %v832, 8.507059e+37
  %v834 = vand.u32 %v822, 2147483648
  %v835 = vor.u32 1.1754944e-38, %v834
  %v836 = vsel %vm833, %v835, %v831
  %v837 = vmul.f32 1.0, %v836
  %v838 = vadd.f32 %v775, %v308
  %840 = vrot.lane.b32.xlu0 %v838, 64
  %v841 = vpop.permute.xlu0 %840
  %v843 = vmul.f32 %v837, %v841
  %845 = vrot.lane.b32.xlu0 %v843, 64
  %v846 = vpop.permute.xlu0 %845
  %v848 = vadd.f32 %v737, %v846
  %v849 = vtanh.pop %v848
  %v850 = vsub.f32 1.0, %v837
  %852 = vrot.lane.b32.xlu0 %v849, 96
  %v853 = vpop.permute.xlu0 %852
  %v855 = vmul.f32 %v850, %v853
  %v856 = vmul.f32 %v837, %v725
  %v857 = vadd.f32 %v855, %v856
  %859 = vrot.lane.b32.xlu0 %v817, 96
  %v860 = vpop.permute.xlu0 %859
  %862 = vst.msk [vmem:[%s732] sm:$0xff] %vm202, %v860
  %863 = vst.msk [vmem:[%s730] sm:$0xff] %vm336, %v857
  %s864 = scalar_lea.vmem [#allocation2], 40
  %v865 = vld [vmem:[%s864] sm:$0xff]
  %s866 = scalar_lea.vmem [#allocation3], 16
  %v867 = vld [vmem:[%s866] sm:$0xff]
  %v868 = vpack.c.bf16 %v817, %v817
  %870 = vrot.lane.b32.xlu0 %v868, 96
  %v871 = vpop.permute.xlu0 %870
  %v873 = vsel %vm202, %v871, 0
  %875 = vmatpush.bf16.msra.mxu0 0
  %876 = vmatpush.bf16.msra.mxu0 0
  %877 = vmatpush.bf16.msra.mxu0 0
  %878 = vmatpush.bf16.msra.mxu0 0
  %879 = vmatpush.bf16.msra.mxu0 0
  %880 = vmatpush.bf16.msra.mxu0 0
  %881 = vmatpush.bf16.msra.mxu0 %v199
  %882 = vmatpush.bf16.msra.mxu0 %v198
  %883 = vmatmul.bf16.gmra.mxu0 %v873
  %v884 = vpop.f32.mrf.mxu0
  %v885 = vadd.f32 0.0, %v884
  %v886 = vpop.f32.mrf.mxu0
  %887 = vdwg.mxu0
  %v888 = vpack.c.bf16 %v857, %v857
  %890 = vrot.lane.b32.xlu0 %v888, 96
  %v891 = vpop.permute.xlu0 %890
  %v893 = vsel %vm202, %v891, 0
  %895 = vmatpush.bf16.msra.mxu0 0
  %896 = vmatpush.bf16.msra.mxu0 0
  %897 = vmatpush.bf16.msra.mxu0 0
  %898 = vmatpush.bf16.msra.mxu0 0
  %899 = vmatpush.bf16.msra.mxu0 0
  %900 = vmatpush.bf16.msra.mxu0 0
  %901 = vmatpush.bf16.msra.mxu0 %v228
  %902 = vmatpush.bf16.msra.mxu0 %v227
  %903 = vmatmul.bf16.gmra.mxu0 %v893
  %v904 = vpop.f32.mrf.mxu0
  %v905 = vadd.f32 0.0, %v904
  %v906 = vpop.f32.mrf.mxu0
  %907 = vdwg.mxu0
  %v908 = vadd.f32 %v865, %v885
  %v909 = vxor.u32 %v908, 2147483648
  %v910 = vmul.f32 %v909, 1.442695
  %v911 = vpow.pop %v910
  %v912 = vadd.f32 %v911, 1.0
  %v913 = vrcp.pop %v912
  %v914 = vmul.f32 %v912, %v913
  %v915 = vsub.f32 1.0, %v914
  %v916 = vmul.f32 %v913, %v915
  %v917 = vadd.f32 %v913, %v916
  %vm918 = vweird.f32 %v912
  %vm919 = vweird.f32 %v913
  %vm920 = vmor %vm918, %vm919
  %v921 = vsel %vm920, %v913, %v917
  %v922 = vand.u32 2147483647, %v912
  %vm923 = vcmp.eq.f32.partialorder %v922, 8.507059e+37
  %v924 = vand.u32 %v912, 2147483648
  %v925 = vor.u32 1.1754944e-38, %v924
  %v926 = vsel %vm923, %v925, %v921
  %v927 = vmul.f32 1.0, %v926
  %v928 = vadd.f32 %v885, %v265
  %930 = vrot.lane.b32.xlu0 %v928, 64
  %v931 = vpop.permute.xlu0 %930
  %v933 = vmul.f32 %v927, %v931
  %935 = vrot.lane.b32.xlu0 %v933, 64
  %v936 = vpop.permute.xlu0 %935
  %v938 = vadd.f32 %v865, %v936
  %v939 = vtanh.pop %v938
  %v940 = vsub.f32 1.0, %v927
  %942 = vrot.lane.b32.xlu0 %v939, 96
  %v943 = vpop.permute.xlu0 %942
  %v945 = vmul.f32 %v940, %v943
  %v946 = vmul.f32 %v927, %v817
  %v947 = vadd.f32 %v945, %v946
  %v948 = vadd.f32 %v867, %v905
  %v949 = vxor.u32 %v948, 2147483648
  %v950 = vmul.f32 %v949, 1.442695
  %v951 = vpow.pop %v950
  %v952 = vadd.f32 %v951, 1.0
  %v953 = vrcp.pop %v952
  %v954 = vmul.f32 %v952, %v953
  %v955 = vsub.f32 1.0, %v954
  %v956 = vmul.f32 %v953, %v955
  %v957 = vadd.f32 %v953, %v956
  %vm958 = vweird.f32 %v952
  %vm959 = vweird.f32 %v953
  %vm960 = vmor %vm958, %vm959
  %v961 = vsel %vm960, %v953, %v957
  %v962 = vand.u32 2147483647, %v952
  %vm963 = vcmp.eq.f32.partialorder %v962, 8.507059e+37
  %v964 = vand.u32 %v952, 2147483648
  %v965 = vor.u32 1.1754944e-38, %v964
  %v966 = vsel %vm963, %v965, %v961
  %v967 = vmul.f32 1.0, %v966
  %v968 = vadd.f32 %v905, %v308
  %970 = vrot.lane.b32.xlu0 %v968, 64
  %v971 = vpop.permute.xlu0 %970
  %v973 = vmul.f32 %v967, %v971
  %975 = vrot.lane.b32.xlu0 %v973, 64
  %v976 = vpop.permute.xlu0 %975
  %v978 = vadd.f32 %v867, %v976
  %v979 = vtanh.pop %v978
  %v980 = vsub.f32 1.0, %v967
  %982 = vrot.lane.b32.xlu0 %v979, 96
  %v983 = vpop.permute.xlu0 %982
  %v985 = vmul.f32 %v980, %v983
  %v986 = vmul.f32 %v967, %v857
  %v987 = vadd.f32 %v985, %v986
  %989 = vrot.lane.b32.xlu0 %v947, 96
  %v990 = vpop.permute.xlu0 %989
  %992 = vst.msk [vmem:[%s600] sm:$0xff] %vm202, %v990
  %993 = vst.msk [vmem:[%s598] sm:$0xff] %vm336, %v987
  %s994 = scalar_lea.vmem [#allocation2], 48
  %v995 = vld [vmem:[%s994] sm:$0xff]
  %s996 = scalar_lea.vmem [#allocation3], 8
  %v997 = vld [vmem:[%s996] sm:$0xff]
  %v998 = vpack.c.bf16 %v947, %v947
  %1000 = vrot.lane.b32.xlu0 %v998, 96
  %v1001 = vpop.permute.xlu0 %1000
  %v1003 = vsel %vm202, %v1001, 0
  %1005 = vmatpush.bf16.msra.mxu0 0
  %1006 = vmatpush.bf16.msra.mxu0 0
  %1007 = vmatpush.bf16.msra.mxu0 0
  %1008 = vmatpush.bf16.msra.mxu0 0
  %1009 = vmatpush.bf16.msra.mxu0 0
  %1010 = vmatpush.bf16.msra.mxu0 0
  %1011 = vmatpush.bf16.msra.mxu0 %v199
  %1012 = vmatpush.bf16.msra.mxu0 %v198
  %1013 = vmatmul.bf16.gmra.mxu0 %v1003
  %v1014 = vpop.f32.mrf.mxu0
  %v1015 = vadd.f32 0.0, %v1014
  %v1016 = vpop.f32.mrf.mxu0
  %1017 = vdwg.mxu0
  %v1018 = vpack.c.bf16 %v987, %v987
  %1020 = vrot.lane.b32.xlu0 %v1018, 96
  %v1021 = vpop.permute.xlu0 %1020
  %v1023 = vsel %vm202, %v1021, 0
  %1025 = vmatpush.bf16.msra.mxu0 0
  %1026 = vmatpush.bf16.msra.mxu0 0
  %1027 = vmatpush.bf16.msra.mxu0 0
  %1028 = vmatpush.bf16.msra.mxu0 0
  %1029 = vmatpush.bf16.msra.mxu0 0
  %1030 = vmatpush.bf16.msra.mxu0 0
  %1031 = vmatpush.bf16.msra.mxu0 %v228
  %1032 = vmatpush.bf16.msra.mxu0 %v227
  %1033 = vmatmul.bf16.gmra.mxu0 %v1023
  %v1034 = vpop.f32.mrf.mxu0
  %v1035 = vadd.f32 0.0, %v1034
  %v1036 = vpop.f32.mrf.mxu0
  %1037 = vdwg.mxu0
  %v1038 = vadd.f32 %v995, %v1015
  %v1039 = vxor.u32 %v1038, 2147483648
  %v1040 = vmul.f32 %v1039, 1.442695
  %v1041 = vpow.pop %v1040
  %v1042 = vadd.f32 %v1041, 1.0
  %v1043 = vrcp.pop %v1042
  %v1044 = vmul.f32 %v1042, %v1043
  %v1045 = vsub.f32 1.0, %v1044
  %v1046 = vmul.f32 %v1043, %v1045
  %v1047 = vadd.f32 %v1043, %v1046
  %vm1048 = vweird.f32 %v1042
  %vm1049 = vweird.f32 %v1043
  %vm1050 = vmor %vm1048, %vm1049
  %v1051 = vsel %vm1050, %v1043, %v1047
  %v1052 = vand.u32 2147483647, %v1042
  %vm1053 = vcmp.eq.f32.partialorder %v1052, 8.507059e+37
  %v1054 = vand.u32 %v1042, 2147483648
  %v1055 = vor.u32 1.1754944e-38, %v1054
  %v1056 = vsel %vm1053, %v1055, %v1051
  %v1057 = vmul.f32 1.0, %v1056
  %v1058 = vadd.f32 %v1015, %v265
  %1060 = vrot.lane.b32.xlu0 %v1058, 64
  %v1061 = vpop.permute.xlu0 %1060
  %v1063 = vmul.f32 %v1057, %v1061
  %1065 = vrot.lane.b32.xlu0 %v1063, 64
  %v1066 = vpop.permute.xlu0 %1065
  %v1068 = vadd.f32 %v995, %v1066
  %v1069 = vtanh.pop %v1068
  %v1070 = vsub.f32 1.0, %v1057
  %1072 = vrot.lane.b32.xlu0 %v1069, 96
  %v1073 = vpop.permute.xlu0 %1072
  %v1075 = vmul.f32 %v1070, %v1073
  %v1076 = vmul.f32 %v1057, %v947
  %v1077 = vadd.f32 %v1075, %v1076
  %v1078 = vadd.f32 %v997, %v1035
  %v1079 = vxor.u32 %v1078, 2147483648
  %v1080 = vmul.f32 %v1079, 1.442695
  %v1081 = vpow.pop %v1080
  %v1082 = vadd.f32 %v1081, 1.0
  %v1083 = vrcp.pop %v1082
  %v1084 = vmul.f32 %v1082, %v1083
  %v1085 = vsub.f32 1.0, %v1084
  %v1086 = vmul.f32 %v1083, %v1085
  %v1087 = vadd.f32 %v1083, %v1086
  %vm1088 = vweird.f32 %v1082
  %vm1089 = vweird.f32 %v1083
  %vm1090 = vmor %vm1088, %vm1089
  %v1091 = vsel %vm1090, %v1083, %v1087
  %v1092 = vand.u32 2147483647, %v1082
  %vm1093 = vcmp.eq.f32.partialorder %v1092, 8.507059e+37
  %v1094 = vand.u32 %v1082, 2147483648
  %v1095 = vor.u32 1.1754944e-38, %v1094
  %v1096 = vsel %vm1093, %v1095, %v1091
  %v1097 = vmul.f32 1.0, %v1096
  %v1098 = vadd.f32 %v1035, %v308
  %1100 = vrot.lane.b32.xlu0 %v1098, 64
  %v1101 = vpop.permute.xlu0 %1100
  %v1103 = vmul.f32 %v1097, %v1101
  %1105 = vrot.lane.b32.xlu0 %v1103, 64
  %v1106 = vpop.permute.xlu0 %1105
  %v1108 = vadd.f32 %v997, %v1106
  %v1109 = vtanh.pop %v1108
  %v1110 = vsub.f32 1.0, %v1097
  %1112 = vrot.lane.b32.xlu0 %v1109, 96
  %v1113 = vpop.permute.xlu0 %1112
  %v1115 = vmul.f32 %v1110, %v1113
  %v1116 = vmul.f32 %v1097, %v987
  %v1117 = vadd.f32 %v1115, %v1116
  %1119 = vrot.lane.b32.xlu0 %v1077, 96
  %v1120 = vpop.permute.xlu0 %1119
  %1122 = vst.msk [vmem:[%s468] sm:$0xff] %vm202, %v1120
  %1123 = vst.msk [vmem:[%s466] sm:$0xff] %vm336, %v1117
  %s1124 = scalar_lea.vmem [#allocation2], 56
  %v1125 = vld [vmem:[%s1124] sm:$0xff]
  %v1126 = vld [vmem:[#allocation3] sm:$0xff]
  %v1127 = vpack.c.bf16 %v1077, %v1077
  %1129 = vrot.lane.b32.xlu0 %v1127, 96
  %v1130 = vpop.permute.xlu0 %1129
  %v1132 = vsel %vm202, %v1130, 0
  %1134 = vmatpush.bf16.msra.mxu0 0
  %1135 = vmatpush.bf16.msra.mxu0 0
  %1136 = vmatpush.bf16.msra.mxu0 0
  %1137 = vmatpush.bf16.msra.mxu0 0
  %1138 = vmatpush.bf16.msra.mxu0 0
  %1139 = vmatpush.bf16.msra.mxu0 0
  %1140 = vmatpush.bf16.msra.mxu0 %v199
  %1141 = vmatpush.bf16.msra.mxu0 %v198
  %1142 = vmatmul.bf16.gmra.mxu0 %v1132
  %v1143 = vpop.f32.mrf.mxu0
  %v1144 = vadd.f32 0.0, %v1143
  %v1145 = vpop.f32.mrf.mxu0
  %1146 = vdwg.mxu0
  %v1147 = vpack.c.bf16 %v1117, %v1117
  %1149 = vrot.lane.b32.xlu0 %v1147, 96
  %v1150 = vpop.permute.xlu0 %1149
  %v1152 = vsel %vm202, %v1150, 0
  %1154 = vmatpush.bf16.msra.mxu0 0
  %1155 = vmatpush.bf16.msra.mxu0 0
  %1156 = vmatpush.bf16.msra.mxu0 0
  %1157 = vmatpush.bf16.msra.mxu0 0
  %1158 = vmatpush.bf16.msra.mxu0 0
  %1159 = vmatpush.bf16.msra.mxu0 0
  %1160 = vmatpush.bf16.msra.mxu0 %v228
  %1161 = vmatpush.bf16.msra.mxu0 %v227
  %1162 = vmatmul.bf16.gmra.mxu0 %v1152
  %v1163 = vpop.f32.mrf.mxu0
  %v1164 = vadd.f32 0.0, %v1163
  %v1165 = vpop.f32.mrf.mxu0
  %1166 = vdwg.mxu0
  %v1167 = vadd.f32 %v1125, %v1144
  %v1168 = vxor.u32 %v1167, 2147483648
  %v1169 = vmul.f32 %v1168, 1.442695
  %v1170 = vpow.pop %v1169
  %v1171 = vadd.f32 %v1170, 1.0
  %v1172 = vrcp.pop %v1171
  %v1173 = vmul.f32 %v1171, %v1172
  %v1174 = vsub.f32 1.0, %v1173
  %v1175 = vmul.f32 %v1172, %v1174
  %v1176 = vadd.f32 %v1172, %v1175
  %vm1177 = vweird.f32 %v1171
  %vm1178 = vweird.f32 %v1172
  %vm1179 = vmor %vm1177, %vm1178
  %v1180 = vsel %vm1179, %v1172, %v1176
  %v1181 = vand.u32 2147483647, %v1171
  %vm1182 = vcmp.eq.f32.partialorder %v1181, 8.507059e+37
  %v1183 = vand.u32 %v1171, 2147483648
  %v1184 = vor.u32 1.1754944e-38, %v1183
  %v1185 = vsel %vm1182, %v1184, %v1180
  %v1186 = vmul.f32 1.0, %v1185
  %v1187 = vadd.f32 %v1144, %v265
  %1189 = vrot.lane.b32.xlu0 %v1187, 64
  %v1190 = vpop.permute.xlu0 %1189
  %v1192 = vmul.f32 %v1186, %v1190
  %1194 = vrot.lane.b32.xlu0 %v1192, 64
  %v1195 = vpop.permute.xlu0 %1194
  %v1197 = vadd.f32 %v1125, %v1195
  %v1198 = vtanh.pop %v1197
  %v1199 = vsub.f32 1.0, %v1186
  %1201 = vrot.lane.b32.xlu0 %v1198, 96
  %v1202 = vpop.permute.xlu0 %1201
  %v1204 = vmul.f32 %v1199, %v1202
  %v1205 = vmul.f32 %v1186, %v1077
  %v1206 = vadd.f32 %v1204, %v1205
  %v1207 = vadd.f32 %v1126, %v1164
  %v1208 = vxor.u32 %v1207, 2147483648
  %v1209 = vmul.f32 %v1208, 1.442695
  %v1210 = vpow.pop %v1209
  %v1211 = vadd.f32 %v1210, 1.0
  %v1212 = vrcp.pop %v1211
  %v1213 = vmul.f32 %v1211, %v1212
  %v1214 = vsub.f32 1.0, %v1213
  %v1215 = vmul.f32 %v1212, %v1214
  %v1216 = vadd.f32 %v1212, %v1215
  %vm1217 = vweird.f32 %v1211
  %vm1218 = vweird.f32 %v1212
  %vm1219 = vmor %vm1217, %vm1218
  %v1220 = vsel %vm1219, %v1212, %v1216
  %v1221 = vand.u32 2147483647, %v1211
  %vm1222 = vcmp.eq.f32.partialorder %v1221, 8.507059e+37
  %v1223 = vand.u32 %v1211, 2147483648
  %v1224 = vor.u32 1.1754944e-38, %v1223
  %v1225 = vsel %vm1222, %v1224, %v1220
  %v1226 = vmul.f32 1.0, %v1225
  %v1227 = vadd.f32 %v1164, %v308
  %1229 = vrot.lane.b32.xlu0 %v1227, 64
  %v1230 = vpop.permute.xlu0 %1229
  %v1232 = vmul.f32 %v1226, %v1230
  %1234 = vrot.lane.b32.xlu0 %v1232, 64
  %v1235 = vpop.permute.xlu0 %1234
  %v1237 = vadd.f32 %v1126, %v1235
  %v1238 = vtanh.pop %v1237
  %v1239 = vsub.f32 1.0, %v1226
  %1241 = vrot.lane.b32.xlu0 %v1238, 96
  %v1242 = vpop.permute.xlu0 %1241
  %v1244 = vmul.f32 %v1239, %v1242
  %v1245 = vmul.f32 %v1226, %v1117
  %v1246 = vadd.f32 %v1244, %v1245
  %1248 = vrot.lane.b32.xlu0 %v1206, 96
  %v1249 = vpop.permute.xlu0 %1248
  %1251 = vst.msk [vmem:[%s335] sm:$0xff] %vm202, %v1249
  %1252 = vst.msk [vmem:[%s9] sm:$0xff] %vm336, %v1246
  // Predicated region
  $region38: #{gru_context.1} parent=0 // pred_check
    _
  $region39: #{gru_context.1} parent=0 // pred_check_branch
    %1254 = sbr.rel (0) target = $region41
  $region40: #{gru_context.1} parent=0 // pred_region
    _
  $region41: #{gru_context.1} parent=0 // pred_fallthru
    _
  // Predicated region
  $region42: #{gru_context.1} parent=0 // pred_check
    _
  $region43: #{gru_context.1} parent=0 // pred_check_branch
    %1256 = sbr.rel (0) target = $region45
  $region44: #{gru_context.1} parent=0 // pred_region
    _
  $region45: #{gru_context.1} parent=0 // pred_fallthru
    _

</llo_original>
